<compile_context>
chip_gen: v7x
topology: tpu7x:2x2x1
jax: 0.10.0
libtpu: 0.0.40
codegen_flags: <defaults>
</compile_context>

<pallas_src>
import functools
import math

import jax
import jax.numpy as jnp
from jax.experimental import pallas as pl
from jax.experimental.pallas import tpu as pltpu  # noqa: F401  (TPU tuning hooks at real sizes)

EPS = 1e-5          # PyTorch LayerNorm default eps
NEG_INF = -1e30     # additive mask value (finite: avoids inf-inf NaNs)


def _layernorm(y, gamma, beta):
    # LayerNorm over the last dim, biased variance (matches torch.nn.LayerNorm)
    mean = jnp.mean(y, axis=-1, keepdims=True)
    var = jnp.mean((y - mean) ** 2, axis=-1, keepdims=True)
    return (y - mean) * jax.lax.rsqrt(var + EPS) * gamma + beta


# ---------------------------------------------------------------------------
# Single fused kernel: MHA + LN1, MLP + LN2, depth x (MLP + LN2)
# ---------------------------------------------------------------------------
def fused_swin_block_kernel(x_ref, bias_ref, wqkv_ref, bqkv_ref, wo_ref, bo_ref,
                            g1_ref, be1_ref,
                            mw1_ref, mb1_ref, mw2_ref, mb2_ref,
                            g2_ref, be2_ref,
                            lw1_ref, lb1_ref, lw2_ref, lb2_ref,
                            o_ref, *, num_heads):
    BL, D = x_ref.shape
    H = num_heads
    hd = D // H
    depth = lw1_ref.shape[0]

    x = x_ref[...]                                             # (BL, D)

    # ---- fused QKV projection: ONE wide MXU matmul (BL, D) @ (D, 3D) -------
    qkv = jnp.dot(x, wqkv_ref[...],
                  preferred_element_type=jnp.float32) + bqkv_ref[...]   # (BL, 3D)

    # head split via static lane slices + leading-axis stack (no reshapes)
    def split_heads(base):
        return jnp.stack(
            [qkv[:, base + h * hd: base + (h + 1) * hd] for h in range(H)], axis=0)

    q = split_heads(0)          # (H, BL, hd); q columns pre-scaled by 1/sqrt(hd)
    k = split_heads(D)
    v = split_heads(2 * D)

    # ---- attention, batched over heads; batch separation via additive bias --
    bias = jnp.broadcast_to(bias_ref[...], (H, BL, BL))        # hoisted broadcast
    s = jnp.einsum('hne,hme->hnm', q, k,
                   preferred_element_type=jnp.float32) + bias  # (H, BL, BL)
    s = s - jnp.max(s, axis=-1, keepdims=True)
    p = jnp.exp(s)
    p = p / jnp.sum(p, axis=-1, keepdims=True)                 # exact softmax
    o = jnp.einsum('hnm,hme->hne', p, v,
                   preferred_element_type=jnp.float32)         # (H, BL, hd)

    # merge heads (lane concat) + ONE wide output projection (BL, D) @ (D, D)
    attn = jnp.concatenate([o[h] for h in range(H)], axis=-1)  # (BL, D)
    attn = jnp.dot(attn, wo_ref[...],
                   preferred_element_type=jnp.float32) + bo_ref[...]

    # hoisted affine broadcasts for all LayerNorms
    g1 = jnp.broadcast_to(g1_ref[...], (BL, D))
    be1 = jnp.broadcast_to(be1_ref[...], (BL, D))
    g2 = jnp.broadcast_to(g2_ref[...], (BL, D))
    be2 = jnp.broadcast_to(be2_ref[...], (BL, D))

    # residual + norm1
    y = _layernorm(x + attn, g1, be1)

    # ---- self.mlp + residual + norm2 ----------------------------------------
    h1 = jnp.maximum(jnp.dot(y, mw1_ref[...],
                             preferred_element_type=jnp.float32) + mb1_ref[...], 0.0)
    m = jnp.dot(h1, mw2_ref[...],
                preferred_element_type=jnp.float32) + mb2_ref[...]
    y = _layernorm(y + m, g2, be2)

    # ---- depth x (mlp_layers[i] + residual + norm2), norm2 weights shared ----
    def body(i, y_carry):
        h = jnp.maximum(jnp.dot(y_carry, lw1_ref[i],
                                preferred_element_type=jnp.float32) + lb1_ref[i], 0.0)
        m = jnp.dot(h, lw2_ref[i],
                    preferred_element_type=jnp.float32) + lb2_ref[i]
        return _layernorm(y_carry + m, g2, be2)

    y = jax.lax.fori_loop(0, depth, body, y)

    # ---- single flat store ---------------------------------------------------
    o_ref[...] = y


# ---------------------------------------------------------------------------
# Wrapper: free weight re-layouts + single pallas_call
# ---------------------------------------------------------------------------
@functools.partial(jax.jit, static_argnames=("num_heads",))
def swin_transformer_block(x, params, num_heads):
    """Full forward pass of SwinTransformerBlock as one fused Pallas kernel."""
    B, L, D = x.shape
    BL = B * L
    hd = D // num_heads
    scale = 1.0 / math.sqrt(hd)
    p = params

    # fused QKV weights; PyTorch's q-scaling folded into the q columns / bias
    wqkv = jnp.concatenate([p["wq"] * scale, p["wk"], p["wv"]], axis=1)   # (D, 3D)
    bqkv = jnp.concatenate([p["bq"] * scale, p["bk"], p["bv"]], axis=1)   # (1, 3D)

    # additive block-diagonal bias: heads-batched attention never crosses batches
    bid = jnp.arange(BL, dtype=jnp.int32) // L
    attn_bias = jnp.where(bid[:, None] == bid[None, :], 0.0, NEG_INF).astype(jnp.float32)

    # stacked per-layer MLP weights, indexed dynamically by the in-kernel fori_loop
    lw1 = jnp.stack([l[0] for l in p["layers"]])      # (depth, D, H2)
    lb1 = jnp.stack([l[1] for l in p["layers"]])      # (depth, 1, H2)
    lw2 = jnp.stack([l[2] for l in p["layers"]])      # (depth, H2, D)
    lb2 = jnp.stack([l[3] for l in p["layers"]])      # (depth, 1, D)

    kernel = functools.partial(fused_swin_block_kernel, num_heads=num_heads)
    y_flat = pl.pallas_call(
        kernel,
        out_shape=jax.ShapeDtypeStruct((BL, D), jnp.float32),
    )(x.reshape(BL, D), attn_bias, wqkv, bqkv, p["wo"], p["bo"], p["g1"], p["be1"],
      p["mw1"], p["mb1"], p["mw2"], p["mb2"], p["g2"], p["be2"],
      lw1, lb1, lw2, lb2)
    return y_flat.reshape(B, L, D)


# ---------------------------------------------------------------------------
# Pure-JAX reference (mirrors the PyTorch module) for a correctness check
# ---------------------------------------------------------------------------
def reference_forward(x, params, num_heads):
    p = params
    B, L, D = x.shape
    hd = D // num_heads

    def ln(y, g, b):
        mu = jnp.mean(y, axis=-1, keepdims=True)
        var = jnp.mean((y - mu) ** 2, axis=-1, keepdims=True)
        return (y - mu) / jnp.sqrt(var + EPS) * g + b

    q = x @ p["wq"] + p["bq"]
    k = x @ p["wk"] + p["bk"]
    v = x @ p["wv"] + p["bv"]

    def split(t):  # (B, L, D) -> (B, H, L, hd)
        return t.reshape(B, L, num_heads, hd).transpose(0, 2, 1, 3)

    qh = split(q) / math.sqrt(hd)
    kh, vh = split(k), split(v)
    s = jnp.einsum("bhqe,bhke->bhqk", qh, kh)
    a = jax.nn.softmax(s, axis=-1)
    o = jnp.einsum("bhqk,bhke->bhqe", a, vh)
    o = o.transpose(0, 2, 1, 3).reshape(B, L, D)
    attn = o @ p["wo"] + p["bo"]
    y = ln(x + attn, p["g1"], p["be1"])
    m = jnp.maximum(y @ p["mw1"] + p["mb1"], 0.0) @ p["mw2"] + p["mb2"]
    y = ln(y + m, p["g2"], p["be2"])
    for (w1, b1, w2, b2) in p["layers"]:
        m = jnp.maximum(y @ w1 + b1, 0.0) @ w2 + b2
        y = ln(y + m, p["g2"], p["be2"])
    return y


if __name__ == "__main__":
    # Small shapes consistent with the module's forward: (B, L, D)
    B, L, D = 2, 8, 32
    num_heads = 4            # head_dim = 8
    mlp_ratio = 4
    depth = 7
    H1 = int(D * mlp_ratio)  # 128, hidden of self.mlp
    H2 = int(D * 1.5)        # 48,  hidden of each mlp_layers[i]

    keys = iter(jax.random.split(jax.random.PRNGKey(0), 64))

    def rn(shape, scale=0.05):
        return scale * jax.random.normal(next(keys), shape, dtype=jnp.float32)

    x = jax.random.normal(next(keys), (B, L, D), dtype=jnp.float32)

    params = dict(
        # attention in_proj (split into q/k/v, stored transposed) + out_proj
        wq=rn((D, D)), wk=rn((D, D)), wv=rn((D, D)),
        bq=rn((1, D)), bk=rn((1, D)), bv=rn((1, D)),
        wo=rn((D, D)), bo=rn((1, D)),
        # norm1 / norm2 affine params
        g1=jnp.ones((1, D), jnp.float32), be1=jnp.zeros((1, D), jnp.float32),
        g2=1.0 + rn((1, D)), be2=rn((1, D)),
        # self.mlp
        mw1=rn((D, H1)), mb1=rn((1, H1)),
        mw2=rn((H1, D)), mb2=rn((1, D)),
        # self.mlp_layers (depth entries)
        layers=[(rn((D, H2)), rn((1, H2)), rn((H2, D)), rn((1, D)))
                for _ in range(depth)],
    )

    y = swin_transformer_block(x, params, num_heads)
    y = jax.block_until_ready(y)

    assert y.shape == (B, L, D)
    assert bool(jnp.all(jnp.isfinite(y)))

    # exact softmax now -> tight tolerance (only MXU f32-pass rounding remains)
    y_ref = reference_forward(x, params, num_heads)
    assert bool(jnp.allclose(y, y_ref, atol=2e-3, rtol=2e-3))

    print("KERNEL_OK")
</pallas_src>

<mosaic_0001>
module attributes {stable_mosaic.version = 11 : i64} {
  func.func @fused_swin_block_kernel(%arg0: memref<16x32xf32, #tpu.memory_space<vmem>>, %arg1: memref<16x16xf32, #tpu.memory_space<vmem>>, %arg2: memref<32x96xf32, #tpu.memory_space<vmem>>, %arg3: memref<1x96xf32, #tpu.memory_space<vmem>>, %arg4: memref<32x32xf32, #tpu.memory_space<vmem>>, %arg5: memref<1x32xf32, #tpu.memory_space<vmem>>, %arg6: memref<1x32xf32, #tpu.memory_space<vmem>>, %arg7: memref<1x32xf32, #tpu.memory_space<vmem>>, %arg8: memref<32x128xf32, #tpu.memory_space<vmem>>, %arg9: memref<1x128xf32, #tpu.memory_space<vmem>>, %arg10: memref<128x32xf32, #tpu.memory_space<vmem>>, %arg11: memref<1x32xf32, #tpu.memory_space<vmem>>, %arg12: memref<1x32xf32, #tpu.memory_space<vmem>>, %arg13: memref<1x32xf32, #tpu.memory_space<vmem>>, %arg14: memref<7x32x48xf32, #tpu.memory_space<vmem>>, %arg15: memref<7x1x48xf32, #tpu.memory_space<vmem>>, %arg16: memref<7x48x32xf32, #tpu.memory_space<vmem>>, %arg17: memref<7x1x32xf32, #tpu.memory_space<vmem>>, %arg18: memref<16x32xf32, #tpu.memory_space<vmem>>) attributes {dimension_semantics = [], scalar_prefetch = 0 : i64, scratch_operands = 0 : i64, tpu.core_type = #tpu.core_type<tc>} {
    %c0 = arith.constant 0 : index
    %c0_0 = arith.constant 0 : index
    %0 = vector.load %arg0[%c0, %c0_0] : memref<16x32xf32, #tpu.memory_space<vmem>>, vector<16x32xf32>
    %c0_1 = arith.constant 0 : index
    %c0_2 = arith.constant 0 : index
    %1 = vector.load %arg2[%c0_1, %c0_2] : memref<32x96xf32, #tpu.memory_space<vmem>>, vector<32x96xf32>
    %cst = arith.constant dense<0.000000e+00> : vector<16x96xf32>
    %2 = tpu.matmul %0, %1, %cst {dimension_numbers = #tpu.dot_dimension_numbers<[1], [0], [0], [1], [0, 0, 1, 1], [], []>} : vector<16x32xf32>, vector<32x96xf32>, vector<16x96xf32> -> vector<16x96xf32>
    %c0_3 = arith.constant 0 : index
    %c0_4 = arith.constant 0 : index
    %3 = vector.load %arg3[%c0_3, %c0_4] : memref<1x96xf32, #tpu.memory_space<vmem>>, vector<1x96xf32>
    %4 = vector.broadcast %3 : vector<1x96xf32> to vector<16x96xf32>
    %5 = arith.addf %2, %4 : vector<16x96xf32>
    %6 = vector.extract_strided_slice %5 {offsets = [0, 0], sizes = [16, 8], strides = [1, 1]} : vector<16x96xf32> to vector<16x8xf32>
    %7 = vector.extract_strided_slice %5 {offsets = [0, 8], sizes = [16, 8], strides = [1, 1]} : vector<16x96xf32> to vector<16x8xf32>
    %8 = vector.extract_strided_slice %5 {offsets = [0, 16], sizes = [16, 8], strides = [1, 1]} : vector<16x96xf32> to vector<16x8xf32>
    %9 = vector.extract_strided_slice %5 {offsets = [0, 24], sizes = [16, 8], strides = [1, 1]} : vector<16x96xf32> to vector<16x8xf32>
    %10 = vector.shape_cast %6 : vector<16x8xf32> to vector<1x16x8xf32>
    %11 = vector.shape_cast %7 : vector<16x8xf32> to vector<1x16x8xf32>
    %12 = vector.shape_cast %8 : vector<16x8xf32> to vector<1x16x8xf32>
    %13 = vector.shape_cast %9 : vector<16x8xf32> to vector<1x16x8xf32>
    %14 = tpu.concatenate %10, %11, %12, %13 in 0 : vector<1x16x8xf32>, vector<1x16x8xf32>, vector<1x16x8xf32>, vector<1x16x8xf32> -> vector<4x16x8xf32>
    %15 = vector.extract_strided_slice %5 {offsets = [0, 32], sizes = [16, 8], strides = [1, 1]} : vector<16x96xf32> to vector<16x8xf32>
    %16 = vector.extract_strided_slice %5 {offsets = [0, 40], sizes = [16, 8], strides = [1, 1]} : vector<16x96xf32> to vector<16x8xf32>
    %17 = vector.extract_strided_slice %5 {offsets = [0, 48], sizes = [16, 8], strides = [1, 1]} : vector<16x96xf32> to vector<16x8xf32>
    %18 = vector.extract_strided_slice %5 {offsets = [0, 56], sizes = [16, 8], strides = [1, 1]} : vector<16x96xf32> to vector<16x8xf32>
    %19 = vector.shape_cast %15 : vector<16x8xf32> to vector<1x16x8xf32>
    %20 = vector.shape_cast %16 : vector<16x8xf32> to vector<1x16x8xf32>
    %21 = vector.shape_cast %17 : vector<16x8xf32> to vector<1x16x8xf32>
    %22 = vector.shape_cast %18 : vector<16x8xf32> to vector<1x16x8xf32>
    %23 = tpu.concatenate %19, %20, %21, %22 in 0 : vector<1x16x8xf32>, vector<1x16x8xf32>, vector<1x16x8xf32>, vector<1x16x8xf32> -> vector<4x16x8xf32>
    %24 = vector.extract_strided_slice %5 {offsets = [0, 64], sizes = [16, 8], strides = [1, 1]} : vector<16x96xf32> to vector<16x8xf32>
    %25 = vector.extract_strided_slice %5 {offsets = [0, 72], sizes = [16, 8], strides = [1, 1]} : vector<16x96xf32> to vector<16x8xf32>
    %26 = vector.extract_strided_slice %5 {offsets = [0, 80], sizes = [16, 8], strides = [1, 1]} : vector<16x96xf32> to vector<16x8xf32>
    %27 = vector.extract_strided_slice %5 {offsets = [0, 88], sizes = [16, 8], strides = [1, 1]} : vector<16x96xf32> to vector<16x8xf32>
    %28 = vector.shape_cast %24 : vector<16x8xf32> to vector<1x16x8xf32>
    %29 = vector.shape_cast %25 : vector<16x8xf32> to vector<1x16x8xf32>
    %30 = vector.shape_cast %26 : vector<16x8xf32> to vector<1x16x8xf32>
    %31 = vector.shape_cast %27 : vector<16x8xf32> to vector<1x16x8xf32>
    %32 = tpu.concatenate %28, %29, %30, %31 in 0 : vector<1x16x8xf32>, vector<1x16x8xf32>, vector<1x16x8xf32>, vector<1x16x8xf32> -> vector<4x16x8xf32>
    %c0_5 = arith.constant 0 : index
    %c0_6 = arith.constant 0 : index
    %33 = vector.load %arg1[%c0_5, %c0_6] : memref<16x16xf32, #tpu.memory_space<vmem>>, vector<16x16xf32>
    %34 = vector.shape_cast %33 : vector<16x16xf32> to vector<1x16x16xf32>
    %35 = vector.broadcast %34 : vector<1x16x16xf32> to vector<4x16x16xf32>
    "tpu.trace_start"() <{level = 10 : i32, message = "hne,hme->hnm"}> : () -> ()
    %cst_7 = arith.constant dense<0.000000e+00> : vector<4x16x16xf32>
    %36 = tpu.matmul %14, %23, %cst_7 {dimension_numbers = #tpu.dot_dimension_numbers<[2], [2], [1], [1], [0, 0, 0, 1, 1, 1], [0], [0]>} : vector<4x16x8xf32>, vector<4x16x8xf32>, vector<4x16x16xf32> -> vector<4x16x16xf32>
    "tpu.trace_stop"() : () -> ()
    %37 = arith.addf %36, %35 : vector<4x16x16xf32>
    %cst_8 = arith.constant dense<0xFF800000> : vector<4x16xf32>
    %38 = vector.multi_reduction <maximumf>, %37, %cst_8 [2] : vector<4x16x16xf32> to vector<4x16xf32>
    %39 = vector.shape_cast %38 : vector<4x16xf32> to vector<4x16x1xf32>
    %40 = vector.broadcast %39 : vector<4x16x1xf32> to vector<4x16x16xf32>
    %41 = arith.subf %37, %40 : vector<4x16x16xf32>
    %42 = math.exp %41 : vector<4x16x16xf32>
    %cst_9 = arith.constant dense<0.000000e+00> : vector<4x16xf32>
    %43 = vector.multi_reduction <add>, %42, %cst_9 [2] : vector<4x16x16xf32> to vector<4x16xf32>
    %44 = vector.shape_cast %43 : vector<4x16xf32> to vector<4x16x1xf32>
    %45 = vector.broadcast %44 : vector<4x16x1xf32> to vector<4x16x16xf32>
    %46 = arith.divf %42, %45 : vector<4x16x16xf32>
    "tpu.trace_start"() <{level = 10 : i32, message = "hnm,hme->hne"}> : () -> ()
    %cst_10 = arith.constant dense<0.000000e+00> : vector<4x16x8xf32>
    %47 = tpu.matmul %46, %32, %cst_10 {dimension_numbers = #tpu.dot_dimension_numbers<[2], [1], [1], [2], [0, 0, 0, 1, 1, 2], [0], [0]>} : vector<4x16x16xf32>, vector<4x16x8xf32>, vector<4x16x8xf32> -> vector<4x16x8xf32>
    "tpu.trace_stop"() : () -> ()
    %48 = vector.extract_strided_slice %47 {offsets = [0, 0, 0], sizes = [1, 16, 8], strides = [1, 1, 1]} : vector<4x16x8xf32> to vector<1x16x8xf32>
    %49 = vector.shape_cast %48 : vector<1x16x8xf32> to vector<16x8xf32>
    %50 = vector.extract_strided_slice %47 {offsets = [1, 0, 0], sizes = [1, 16, 8], strides = [1, 1, 1]} : vector<4x16x8xf32> to vector<1x16x8xf32>
    %51 = vector.shape_cast %50 : vector<1x16x8xf32> to vector<16x8xf32>
    %52 = vector.extract_strided_slice %47 {offsets = [2, 0, 0], sizes = [1, 16, 8], strides = [1, 1, 1]} : vector<4x16x8xf32> to vector<1x16x8xf32>
    %53 = vector.shape_cast %52 : vector<1x16x8xf32> to vector<16x8xf32>
    %54 = vector.extract_strided_slice %47 {offsets = [3, 0, 0], sizes = [1, 16, 8], strides = [1, 1, 1]} : vector<4x16x8xf32> to vector<1x16x8xf32>
    %55 = vector.shape_cast %54 : vector<1x16x8xf32> to vector<16x8xf32>
    %56 = tpu.concatenate %49, %51, %53, %55 in 1 : vector<16x8xf32>, vector<16x8xf32>, vector<16x8xf32>, vector<16x8xf32> -> vector<16x32xf32>
    %c0_11 = arith.constant 0 : index
    %c0_12 = arith.constant 0 : index
    %57 = vector.load %arg4[%c0_11, %c0_12] : memref<32x32xf32, #tpu.memory_space<vmem>>, vector<32x32xf32>
    %cst_13 = arith.constant dense<0.000000e+00> : vector<16x32xf32>
    %58 = tpu.matmul %56, %57, %cst_13 {dimension_numbers = #tpu.dot_dimension_numbers<[1], [0], [0], [1], [0, 0, 1, 1], [], []>} : vector<16x32xf32>, vector<32x32xf32>, vector<16x32xf32> -> vector<16x32xf32>
    %c0_14 = arith.constant 0 : index
    %c0_15 = arith.constant 0 : index
    %59 = vector.load %arg5[%c0_14, %c0_15] : memref<1x32xf32, #tpu.memory_space<vmem>>, vector<1x32xf32>
    %60 = vector.broadcast %59 : vector<1x32xf32> to vector<16x32xf32>
    %61 = arith.addf %58, %60 : vector<16x32xf32>
    %c0_16 = arith.constant 0 : index
    %c0_17 = arith.constant 0 : index
    %62 = vector.load %arg6[%c0_16, %c0_17] : memref<1x32xf32, #tpu.memory_space<vmem>>, vector<1x32xf32>
    %63 = vector.shape_cast %62 : vector<1x32xf32> to vector<1x32xf32>
    %64 = vector.broadcast %63 : vector<1x32xf32> to vector<16x32xf32>
    %c0_18 = arith.constant 0 : index
    %c0_19 = arith.constant 0 : index
    %65 = vector.load %arg7[%c0_18, %c0_19] : memref<1x32xf32, #tpu.memory_space<vmem>>, vector<1x32xf32>
    %66 = vector.shape_cast %65 : vector<1x32xf32> to vector<1x32xf32>
    %67 = vector.broadcast %66 : vector<1x32xf32> to vector<16x32xf32>
    %c0_20 = arith.constant 0 : index
    %c0_21 = arith.constant 0 : index
    %68 = vector.load %arg12[%c0_20, %c0_21] : memref<1x32xf32, #tpu.memory_space<vmem>>, vector<1x32xf32>
    %69 = vector.shape_cast %68 : vector<1x32xf32> to vector<1x32xf32>
    %70 = vector.broadcast %69 : vector<1x32xf32> to vector<16x32xf32>
    %c0_22 = arith.constant 0 : index
    %c0_23 = arith.constant 0 : index
    %71 = vector.load %arg13[%c0_22, %c0_23] : memref<1x32xf32, #tpu.memory_space<vmem>>, vector<1x32xf32>
    %72 = vector.shape_cast %71 : vector<1x32xf32> to vector<1x32xf32>
    %73 = vector.broadcast %72 : vector<1x32xf32> to vector<16x32xf32>
    %74 = arith.addf %0, %61 : vector<16x32xf32>
    %cst_24 = arith.constant dense<0.000000e+00> : vector<16xf32>
    %75 = vector.multi_reduction <add>, %74, %cst_24 [1] : vector<16x32xf32> to vector<16xf32>
    %76 = vector.shape_cast %75 : vector<16xf32> to vector<16x1xf32>
    %cst_25 = arith.constant 3.200000e+01 : f32
    %77 = vector.broadcast %cst_25 : f32 to vector<16x1xf32>
    %78 = arith.divf %76, %77 : vector<16x1xf32>
    %79 = vector.broadcast %78 : vector<16x1xf32> to vector<16x32xf32>
    %80 = arith.subf %74, %79 : vector<16x32xf32>
    %81 = arith.mulf %80, %80 : vector<16x32xf32>
    %cst_26 = arith.constant dense<0.000000e+00> : vector<16xf32>
    %82 = vector.multi_reduction <add>, %81, %cst_26 [1] : vector<16x32xf32> to vector<16xf32>
    %83 = vector.shape_cast %82 : vector<16xf32> to vector<16x1xf32>
    %cst_27 = arith.constant 3.200000e+01 : f32
    %84 = vector.broadcast %cst_27 : f32 to vector<16x1xf32>
    %85 = arith.divf %83, %84 : vector<16x1xf32>
    %86 = vector.broadcast %78 : vector<16x1xf32> to vector<16x32xf32>
    %87 = arith.subf %74, %86 : vector<16x32xf32>
    %cst_28 = arith.constant 9.99999974E-6 : f32
    %88 = vector.broadcast %cst_28 : f32 to vector<16x1xf32>
    %89 = arith.addf %85, %88 : vector<16x1xf32>
    %90 = math.rsqrt %89 : vector<16x1xf32>
    %91 = vector.broadcast %90 : vector<16x1xf32> to vector<16x32xf32>
    %92 = arith.mulf %87, %91 : vector<16x32xf32>
    %93 = arith.mulf %92, %64 : vector<16x32xf32>
    %94 = arith.addf %93, %67 : vector<16x32xf32>
    %c0_29 = arith.constant 0 : index
    %c0_30 = arith.constant 0 : index
    %95 = vector.load %arg8[%c0_29, %c0_30] : memref<32x128xf32, #tpu.memory_space<vmem>>, vector<32x128xf32>
    %cst_31 = arith.constant dense<0.000000e+00> : vector<16x128xf32>
    %96 = tpu.matmul %94, %95, %cst_31 {dimension_numbers = #tpu.dot_dimension_numbers<[1], [0], [0], [1], [0, 0, 1, 1], [], []>} : vector<16x32xf32>, vector<32x128xf32>, vector<16x128xf32> -> vector<16x128xf32>
    %c0_32 = arith.constant 0 : index
    %c0_33 = arith.constant 0 : index
    %97 = vector.load %arg9[%c0_32, %c0_33] : memref<1x128xf32, #tpu.memory_space<vmem>>, vector<1x128xf32>
    %98 = vector.broadcast %97 : vector<1x128xf32> to vector<16x128xf32>
    %99 = arith.addf %96, %98 : vector<16x128xf32>
    %cst_34 = arith.constant 0.000000e+00 : f32
    %100 = vector.broadcast %cst_34 : f32 to vector<16x128xf32>
    %101 = arith.maximumf %99, %100 : vector<16x128xf32>
    %c0_35 = arith.constant 0 : index
    %c0_36 = arith.constant 0 : index
    %102 = vector.load %arg10[%c0_35, %c0_36] : memref<128x32xf32, #tpu.memory_space<vmem>>, vector<128x32xf32>
    %cst_37 = arith.constant dense<0.000000e+00> : vector<16x32xf32>
    %103 = tpu.matmul %101, %102, %cst_37 {dimension_numbers = #tpu.dot_dimension_numbers<[1], [0], [0], [1], [0, 0, 1, 1], [], []>} : vector<16x128xf32>, vector<128x32xf32>, vector<16x32xf32> -> vector<16x32xf32>
    %c0_38 = arith.constant 0 : index
    %c0_39 = arith.constant 0 : index
    %104 = vector.load %arg11[%c0_38, %c0_39] : memref<1x32xf32, #tpu.memory_space<vmem>>, vector<1x32xf32>
    %105 = vector.broadcast %104 : vector<1x32xf32> to vector<16x32xf32>
    %106 = arith.addf %103, %105 : vector<16x32xf32>
    %107 = arith.addf %94, %106 : vector<16x32xf32>
    %cst_40 = arith.constant dense<0.000000e+00> : vector<16xf32>
    %108 = vector.multi_reduction <add>, %107, %cst_40 [1] : vector<16x32xf32> to vector<16xf32>
    %109 = vector.shape_cast %108 : vector<16xf32> to vector<16x1xf32>
    %cst_41 = arith.constant 3.200000e+01 : f32
    %110 = vector.broadcast %cst_41 : f32 to vector<16x1xf32>
    %111 = arith.divf %109, %110 : vector<16x1xf32>
    %112 = vector.broadcast %111 : vector<16x1xf32> to vector<16x32xf32>
    %113 = arith.subf %107, %112 : vector<16x32xf32>
    %114 = arith.mulf %113, %113 : vector<16x32xf32>
    %cst_42 = arith.constant dense<0.000000e+00> : vector<16xf32>
    %115 = vector.multi_reduction <add>, %114, %cst_42 [1] : vector<16x32xf32> to vector<16xf32>
    %116 = vector.shape_cast %115 : vector<16xf32> to vector<16x1xf32>
    %cst_43 = arith.constant 3.200000e+01 : f32
    %117 = vector.broadcast %cst_43 : f32 to vector<16x1xf32>
    %118 = arith.divf %116, %117 : vector<16x1xf32>
    %119 = vector.broadcast %111 : vector<16x1xf32> to vector<16x32xf32>
    %120 = arith.subf %107, %119 : vector<16x32xf32>
    %cst_44 = arith.constant 9.99999974E-6 : f32
    %121 = vector.broadcast %cst_44 : f32 to vector<16x1xf32>
    %122 = arith.addf %118, %121 : vector<16x1xf32>
    %123 = math.rsqrt %122 : vector<16x1xf32>
    %124 = vector.broadcast %123 : vector<16x1xf32> to vector<16x32xf32>
    %125 = arith.mulf %120, %124 : vector<16x32xf32>
    %126 = arith.mulf %125, %70 : vector<16x32xf32>
    %127 = arith.addf %126, %73 : vector<16x32xf32>
    %c0_i32 = arith.constant 0 : i32
    %c7_i32 = arith.constant 7 : i32
    %128 = arith.addi %c0_i32, %c7_i32 : i32
    %c1_i32 = arith.constant 1 : i32
    %129 = scf.for %arg19 = %c0_i32 to %128 step %c1_i32 iter_args(%arg20 = %127) -> (vector<16x32xf32>)  : i32 {
      %131 = arith.index_cast %arg19 : i32 to index
      %c0_48 = arith.constant 0 : index
      %c0_49 = arith.constant 0 : index
      %132 = vector.load %arg14[%131, %c0_48, %c0_49] : memref<7x32x48xf32, #tpu.memory_space<vmem>>, vector<1x32x48xf32>
      %133 = vector.shape_cast %132 : vector<1x32x48xf32> to vector<32x48xf32>
      %cst_50 = arith.constant dense<0.000000e+00> : vector<16x48xf32>
      %134 = tpu.matmul %arg20, %133, %cst_50 {dimension_numbers = #tpu.dot_dimension_numbers<[1], [0], [0], [1], [0, 0, 1, 1], [], []>} : vector<16x32xf32>, vector<32x48xf32>, vector<16x48xf32> -> vector<16x48xf32>
      %135 = arith.index_cast %arg19 : i32 to index
      %c0_51 = arith.constant 0 : index
      %c0_52 = arith.constant 0 : index
      %136 = vector.load %arg15[%135, %c0_51, %c0_52] : memref<7x1x48xf32, #tpu.memory_space<vmem>>, vector<1x1x48xf32>
      %137 = vector.shape_cast %136 : vector<1x1x48xf32> to vector<1x48xf32>
      %138 = vector.broadcast %137 : vector<1x48xf32> to vector<16x48xf32>
      %139 = arith.addf %134, %138 : vector<16x48xf32>
      %cst_53 = arith.constant 0.000000e+00 : f32
      %140 = vector.broadcast %cst_53 : f32 to vector<16x48xf32>
      %141 = arith.maximumf %139, %140 : vector<16x48xf32>
      %142 = arith.index_cast %arg19 : i32 to index
      %c0_54 = arith.constant 0 : index
      %c0_55 = arith.constant 0 : index
      %143 = vector.load %arg16[%142, %c0_54, %c0_55] : memref<7x48x32xf32, #tpu.memory_space<vmem>>, vector<1x48x32xf32>
      %144 = vector.shape_cast %143 : vector<1x48x32xf32> to vector<48x32xf32>
      %cst_56 = arith.constant dense<0.000000e+00> : vector<16x32xf32>
      %145 = tpu.matmul %141, %144, %cst_56 {dimension_numbers = #tpu.dot_dimension_numbers<[1], [0], [0], [1], [0, 0, 1, 1], [], []>} : vector<16x48xf32>, vector<48x32xf32>, vector<16x32xf32> -> vector<16x32xf32>
      %146 = arith.index_cast %arg19 : i32 to index
      %c0_57 = arith.constant 0 : index
      %c0_58 = arith.constant 0 : index
      %147 = vector.load %arg17[%146, %c0_57, %c0_58] : memref<7x1x32xf32, #tpu.memory_space<vmem>>, vector<1x1x32xf32>
      %148 = vector.shape_cast %147 : vector<1x1x32xf32> to vector<1x32xf32>
      %149 = vector.broadcast %148 : vector<1x32xf32> to vector<16x32xf32>
      %150 = arith.addf %145, %149 : vector<16x32xf32>
      %151 = arith.addf %arg20, %150 : vector<16x32xf32>
      %cst_59 = arith.constant dense<0.000000e+00> : vector<16xf32>
      %152 = vector.multi_reduction <add>, %151, %cst_59 [1] : vector<16x32xf32> to vector<16xf32>
      %153 = vector.shape_cast %152 : vector<16xf32> to vector<16x1xf32>
      %cst_60 = arith.constant 3.200000e+01 : f32
      %154 = vector.broadcast %cst_60 : f32 to vector<16x1xf32>
      %155 = arith.divf %153, %154 : vector<16x1xf32>
      %156 = vector.broadcast %155 : vector<16x1xf32> to vector<16x32xf32>
      %157 = arith.subf %151, %156 : vector<16x32xf32>
      %158 = arith.mulf %157, %157 : vector<16x32xf32>
      %cst_61 = arith.constant dense<0.000000e+00> : vector<16xf32>
      %159 = vector.multi_reduction <add>, %158, %cst_61 [1] : vector<16x32xf32> to vector<16xf32>
      %160 = vector.shape_cast %159 : vector<16xf32> to vector<16x1xf32>
      %cst_62 = arith.constant 3.200000e+01 : f32
      %161 = vector.broadcast %cst_62 : f32 to vector<16x1xf32>
      %162 = arith.divf %160, %161 : vector<16x1xf32>
      %163 = vector.broadcast %155 : vector<16x1xf32> to vector<16x32xf32>
      %164 = arith.subf %151, %163 : vector<16x32xf32>
      %cst_63 = arith.constant 9.99999974E-6 : f32
      %165 = vector.broadcast %cst_63 : f32 to vector<16x1xf32>
      %166 = arith.addf %162, %165 : vector<16x1xf32>
      %167 = math.rsqrt %166 : vector<16x1xf32>
      %168 = vector.broadcast %167 : vector<16x1xf32> to vector<16x32xf32>
      %169 = arith.mulf %164, %168 : vector<16x32xf32>
      %170 = arith.mulf %169, %70 : vector<16x32xf32>
      %171 = arith.addf %170, %73 : vector<16x32xf32>
      scf.yield %171 : vector<16x32xf32>
    }
    %c7_i32_45 = arith.constant 7 : i32
    %c0_46 = arith.constant 0 : index
    %c0_47 = arith.constant 0 : index
    %130 = vector.load %arg18[%c0_46, %c0_47] : memref<16x32xf32, #tpu.memory_space<vmem>>, vector<16x32xf32>
    tpu.vector_store %arg18[%c0_46, %c0_47], %129 {strides = array<i32>} : memref<16x32xf32, #tpu.memory_space<vmem>>, vector<16x32xf32>,
    return
  }
}

</mosaic_0001>

<llo_original>
// kernel: swin_transformer_block.1
$region0: #{swin_transformer_block.1}
  #allocation0 [shape = 'u32[]', space=smem, size = 0x4, offset = 0x4, fixed_abs, tag = 'smem constant byte address 0x4 - core index']
  #allocation1 [shape = 'u32[144,128]{1,0:T(1,128)}', space=vmem, size = 0x12000, scoped, tag = 'internal scratch']
  %s0 = inlined_call_operand.vmem [shape: f32[16,32], index: 0, kind: input, shape index: {}]
  %s1 = inlined_call_operand.vmem [shape: f32[16,16], index: 1, kind: input, shape index: {}]
  %s2 = inlined_call_operand.vmem [shape: f32[32,96], index: 2, kind: input, shape index: {}]
  %s3 = inlined_call_operand.vmem [shape: f32[1,96], index: 3, kind: input, shape index: {}]
  %s4 = inlined_call_operand.vmem [shape: f32[32,32], index: 4, kind: input, shape index: {}]
  %s5 = inlined_call_operand.vmem [shape: f32[1,32], index: 5, kind: input, shape index: {}]
  %s6 = inlined_call_operand.vmem [shape: f32[1,32], index: 6, kind: input, shape index: {}]
  %s7 = inlined_call_operand.vmem [shape: f32[1,32], index: 7, kind: input, shape index: {}]
  %s8 = inlined_call_operand.vmem [shape: f32[32,128], index: 8, kind: input, shape index: {}]
  %s9 = inlined_call_operand.vmem [shape: f32[1,128], index: 9, kind: input, shape index: {}]
  %s10 = inlined_call_operand.vmem [shape: f32[128,32], index: 10, kind: input, shape index: {}]
  %s11 = inlined_call_operand.vmem [shape: f32[1,32], index: 11, kind: input, shape index: {}]
  %s12 = inlined_call_operand.vmem [shape: f32[1,32], index: 12, kind: input, shape index: {}]
  %s13 = inlined_call_operand.vmem [shape: f32[1,32], index: 13, kind: input, shape index: {}]
  %s14 = inlined_call_operand.vmem [shape: f32[7,32,48], index: 14, kind: input, shape index: {}]
  %s15 = inlined_call_operand.vmem [shape: f32[7,1,48], index: 15, kind: input, shape index: {}]
  %s16 = inlined_call_operand.vmem [shape: f32[7,48,32], index: 16, kind: input, shape index: {}]
  %s17 = inlined_call_operand.vmem [shape: f32[7,1,32], index: 17, kind: input, shape index: {}]
  %s18 = inlined_call_operand.hbm [shape: f32[16,32], index: 18, kind: output, shape index: {}]
  %s19 = sld [smem:[#allocation0]]
  $region89: #{swin_transformer_block.1} parent=0
    _
  %s21 = ssub.s32 1, %s19
  %s22 = scalar_select 0, %s21, %s19
  $region1: #{swin_transformer_block.1} parent=0
    #allocation2 [shape = 'u8[8192]{0}', space=vmem, size = 0x2000, scoped, tag = 'output window, operand 0, single buffered']
    #allocation3 [shape = 's32[1]{0}', space=sflag, size = 0x4, scoped, tag = 'scoped memory for swin_transformer_block.1']
    %23 = vsyncpa [#allocation3], 0
    // Predicated region
    $region2: #{swin_transformer_block.1} parent=1 // pred_check
      _
    $region3: #{swin_transformer_block.1} parent=1 // pred_check_branch
      %25 = sbr.rel (0) target = $region5
    $region4: #{swin_transformer_block.1} parent=1 // pred_region
      _
    $region5: #{swin_transformer_block.1} parent=1 // pred_fallthru
      _
    // Predicated region
    $region6: #{swin_transformer_block.1} parent=1 // pred_check
      _
    $region7: #{swin_transformer_block.1} parent=1 // pred_check_branch
      %27 = sbr.rel (0) target = $region9
    $region8: #{swin_transformer_block.1} parent=1 // pred_region
      _
    $region9: #{swin_transformer_block.1} parent=1 // pred_fallthru
      _
    // Predicated region
    $region10: #{swin_transformer_block.1} parent=1 // pred_check
      _
    $region11: #{swin_transformer_block.1} parent=1 // pred_check_branch
      %29 = sbr.rel (0) target = $region13
    $region12: #{swin_transformer_block.1} parent=1 // pred_region
      _
    $region13: #{swin_transformer_block.1} parent=1 // pred_fallthru
      _
    // Predicated region
    $region14: #{swin_transformer_block.1} parent=1 // pred_check
      _
    $region15: #{swin_transformer_block.1} parent=1 // pred_check_branch
      %31 = sbr.rel (0) target = $region17
    $region16: #{swin_transformer_block.1} parent=1 // pred_region
      _
    $region17: #{swin_transformer_block.1} parent=1 // pred_fallthru
      _
    // Predicated region
    $region18: #{swin_transformer_block.1} parent=1 // pred_check
      _
    $region19: #{swin_transformer_block.1} parent=1 // pred_check_branch
      %33 = sbr.rel (0) target = $region21
    $region20: #{swin_transformer_block.1} parent=1 // pred_region
      _
    $region21: #{swin_transformer_block.1} parent=1 // pred_fallthru
      _
    // Predicated region
    $region22: #{swin_transformer_block.1} parent=1 // pred_check
      _
    $region23: #{swin_transformer_block.1} parent=1 // pred_check_branch
      %35 = sbr.rel (0) target = $region25
    $region24: #{swin_transformer_block.1} parent=1 // pred_region
      _
    $region25: #{swin_transformer_block.1} parent=1 // pred_fallthru
      _
    // Predicated region
    $region26: #{swin_transformer_block.1} parent=1 // pred_check
      _
    $region27: #{swin_transformer_block.1} parent=1 // pred_check_branch
      %37 = sbr.rel (0) target = $region29
    $region28: #{swin_transformer_block.1} parent=1 // pred_region
      _
    $region29: #{swin_transformer_block.1} parent=1 // pred_fallthru
      _
    // Predicated region
    $region30: #{swin_transformer_block.1} parent=1 // pred_check
      _
    $region31: #{swin_transformer_block.1} parent=1 // pred_check_branch
      %39 = sbr.rel (0) target = $region33
    $region32: #{swin_transformer_block.1} parent=1 // pred_region
      _
    $region33: #{swin_transformer_block.1} parent=1 // pred_fallthru
      _
    // Predicated region
    $region34: #{swin_transformer_block.1} parent=1 // pred_check
      _
    $region35: #{swin_transformer_block.1} parent=1 // pred_check_branch
      %41 = sbr.rel (0) target = $region37
    $region36: #{swin_transformer_block.1} parent=1 // pred_region
      _
    $region37: #{swin_transformer_block.1} parent=1 // pred_fallthru
      _
    // Predicated region
    $region38: #{swin_transformer_block.1} parent=1 // pred_check
      _
    $region39: #{swin_transformer_block.1} parent=1 // pred_check_branch
      %43 = sbr.rel (0) target = $region41
    $region40: #{swin_transformer_block.1} parent=1 // pred_region
      _
    $region41: #{swin_transformer_block.1} parent=1 // pred_fallthru
      _
    // Predicated region
    $region42: #{swin_transformer_block.1} parent=1 // pred_check
      _
    $region43: #{swin_transformer_block.1} parent=1 // pred_check_branch
      %45 = sbr.rel (0) target = $region45
    $region44: #{swin_transformer_block.1} parent=1 // pred_region
      _
    $region45: #{swin_transformer_block.1} parent=1 // pred_fallthru
      _
    // Predicated region
    $region46: #{swin_transformer_block.1} parent=1 // pred_check
      _
    $region47: #{swin_transformer_block.1} parent=1 // pred_check_branch
      %47 = sbr.rel (0) target = $region49
    $region48: #{swin_transformer_block.1} parent=1 // pred_region
      _
    $region49: #{swin_transformer_block.1} parent=1 // pred_fallthru
      _
    // Predicated region
    $region50: #{swin_transformer_block.1} parent=1 // pred_check
      _
    $region51: #{swin_transformer_block.1} parent=1 // pred_check_branch
      %49 = sbr.rel (0) target = $region53
    $region52: #{swin_transformer_block.1} parent=1 // pred_region
      _
    $region53: #{swin_transformer_block.1} parent=1 // pred_fallthru
      _
    // Predicated region
    $region54: #{swin_transformer_block.1} parent=1 // pred_check
      _
    $region55: #{swin_transformer_block.1} parent=1 // pred_check_branch
      %51 = sbr.rel (0) target = $region57
    $region56: #{swin_transformer_block.1} parent=1 // pred_region
      _
    $region57: #{swin_transformer_block.1} parent=1 // pred_fallthru
      _
    // Predicated region
    $region58: #{swin_transformer_block.1} parent=1 // pred_check
      _
    $region59: #{swin_transformer_block.1} parent=1 // pred_check_branch
      %53 = sbr.rel (0) target = $region61
    $region60: #{swin_transformer_block.1} parent=1 // pred_region
      _
    $region61: #{swin_transformer_block.1} parent=1 // pred_fallthru
      _
    // Predicated region
    $region62: #{swin_transformer_block.1} parent=1 // pred_check
      _
    $region63: #{swin_transformer_block.1} parent=1 // pred_check_branch
      %55 = sbr.rel (0) target = $region65
    $region64: #{swin_transformer_block.1} parent=1 // pred_region
      _
    $region65: #{swin_transformer_block.1} parent=1 // pred_fallthru
      _
    // Predicated region
    $region66: #{swin_transformer_block.1} parent=1 // pred_check
      _
    $region67: #{swin_transformer_block.1} parent=1 // pred_check_branch
      %57 = sbr.rel (0) target = $region69
    $region68: #{swin_transformer_block.1} parent=1 // pred_region
      _
    $region69: #{swin_transformer_block.1} parent=1 // pred_fallthru
      _
    // Predicated region
    $region70: #{swin_transformer_block.1} parent=1 // pred_check
      _
    $region71: #{swin_transformer_block.1} parent=1 // pred_check_branch
      %59 = sbr.rel (0) target = $region73
    $region72: #{swin_transformer_block.1} parent=1 // pred_region
      _
    $region73: #{swin_transformer_block.1} parent=1 // pred_fallthru
      _
    %v60 = vld [vmem:[%s0] sm:$0xff]
    %v61 = vld [vmem:[%s0 + $0x8] sm:$0xff]
    %v62 = vld [vmem:[%s2] sm:$0xff]
    %v63 = vld [vmem:[%s2 + $0x8] sm:$0xff]
    %v64 = vld [vmem:[%s2 + $0x10] sm:$0xff]
    %v65 = vld [vmem:[%s2 + $0x18] sm:$0xff]
    %v66 = vld [vmem:[%s3] sm:$0x1]
    %v68 = vlaneseq
    %v69 = vshrl.u32 %v68, 7
    %v70 = vsub.s32 0, %v69
    %v71 = vrot.slane %v66, %v70
    %vm73 = vcmask 261120
    %v75 = vsel %vm73, %v60, 0
    %v78 = vsel %vm73, %v61, 0
    %80 = vmatprep.subr.mxu0 0.0
    %81 = vmatpush1.msra.mxu0 %v62
    %82 = vmatprep.subr.mxu0 0.0
    %83 = vmatpush1.msra.mxu0 %v63
    %84 = vmatprep.subr.mxu0 0.0
    %85 = vmatpush1.msra.mxu0 %v64
    %86 = vmatprep.subr.mxu0 0.0
    %87 = vmatpush1.msra.mxu0 %v65
    %88 = vmatprep.subr.mxu0 0.0
    %89 = vmatpush1.msra.mxu0 0.0
    %90 = vmatprep.subr.mxu0 0.0
    %91 = vmatpush1.msra.mxu0 0.0
    %92 = vmatprep.subr.mxu0 0.0
    %93 = vmatpush1.msra.mxu0 0.0
    %94 = vmatprep.subr.mxu0 0.0
    %95 = vmatpush1.msra.mxu0 0.0
    %96 = vmatprep.subr.mxu0 0.0
    %97 = vmatpush1.msra.mxu0 0.0
    %98 = vmatprep.subr.mxu0 0.0
    %99 = vmatpush1.msra.mxu0 0.0
    %100 = vmatprep.subr.mxu0 0.0
    %101 = vmatpush1.msra.mxu0 0.0
    %102 = vmatprep.subr.mxu0 0.0
    %103 = vmatpush1.msra.mxu0 0.0
    %104 = vmatprep.subr.mxu0 0.0
    %105 = vmatpush1.msra.mxu0 0.0
    %106 = vmatprep.subr.mxu0 0.0
    %107 = vmatpush1.msra.mxu0 0.0
    %108 = vmatprep.subr.mxu0 0.0
    %109 = vmatpush1.msra.mxu0 0.0
    %110 = vmatprep.subr.mxu0 0.0
    %111 = vmatpush1.msra.mxu0 0.0
    %112 = vmatprep.subr.mxu0 0.0
    %113 = vmatpush1.msra.mxu0 0.0
    %114 = vmatprep.subr.mxu0 0.0
    %115 = vmatpush1.msra.mxu0 0.0
    %116 = vmatprep.subr.mxu0 0.0
    %117 = vmatpush1.msra.mxu0 0.0
    %118 = vmatprep.subr.mxu0 0.0
    %119 = vmatpush1.msra.mxu0 0.0
    %120 = vmatprep.subr.mxu0 0.0
    %121 = vmatpush1.msra.mxu0 0.0
    %122 = vmatprep.subr.mxu0 0.0
    %123 = vmatpush1.msra.mxu0 0.0
    %124 = vmatprep.subr.mxu0 0.0
    %125 = vmatpush1.msra.mxu0 0.0
    %126 = vmatprep.subr.mxu0 0.0
    %127 = vmatpush1.msra.mxu0 0.0
    %128 = vmatprep.subr.mxu0 0.0
    %129 = vmatpush1.msra.mxu0 0.0
    %130 = vmatprep.subr.mxu0 0.0
    %131 = vmatpush1.msra.mxu0 0.0
    %132 = vmatprep.subr.mxu0 0.0
    %133 = vmatpush1.msra.mxu0 0.0
    %134 = vmatprep.subr.mxu0 0.0
    %135 = vmatpush1.msra.mxu0 0.0
    %136 = vmatprep.subr.mxu0 0.0
    %137 = vmatpush1.msra.mxu0 0.0
    %138 = vmatprep.subr.mxu0 0.0
    %139 = vmatpush1.msra.mxu0 0.0
    %140 = vmatprep.subr.mxu0 0.0
    %141 = vmatpush1.msra.mxu0 0.0
    %142 = vmatprep.subr.mxu0 0.0
    %143 = vmatpush1.msra.mxu0 0.0
    %144 = vmatprep.mubr.f32.mxu0 0.0
    %145 = vmatmul.mubr.f32.gmra.mrb[0].mxu0 %v75
    %v146 = vpop.f32.mrb[0].mxu0
    %v147 = vadd.f32 %v71, %v146
    %v148 = vpop.f32.mrb[0].mxu0
    %149 = vmatprep.mubr.f32.mxu0 0.0
    %150 = vmatmul.mubr.f32.gmra.mrb[0].mxu0 %v78
    %v151 = vpop.f32.mrb[0].mxu0
    %v152 = vadd.f32 %v71, %v151
    %v153 = vpop.f32.mrb[0].mxu0
    %154 = vdwg.mxu0
    %157 = vrot.lane.b32.xlu0 %v147, 120
    %v158 = vpop.permute.xlu0 %157
    %159 = vrot.lane.b32.xlu0 %v152, 120
    %v160 = vpop.permute.xlu0 %159
    %161 = vrot.lane.b32.xlu0 %v147, 112
    %v162 = vpop.permute.xlu0 %161
    %163 = vrot.lane.b32.xlu0 %v152, 112
    %v164 = vpop.permute.xlu0 %163
    %165 = vrot.lane.b32.xlu0 %v147, 104
    %v166 = vpop.permute.xlu0 %165
    %167 = vrot.lane.b32.xlu0 %v152, 104
    %v168 = vpop.permute.xlu0 %167
    %v169 = vld [vmem:[%s1] sm:$0xff]
    %v170 = vld [vmem:[%s1 + $0x8] sm:$0xff]
    %171 = vrot.lane.b32.xlu0 %v147, 96
    %v172 = vpop.permute.xlu0 %171
    %173 = vrot.lane.b32.xlu0 %v152, 96
    %v174 = vpop.permute.xlu0 %173
    %vm175 = vcmask 64512
    %v176 = vsel %vm175, %v147, 0
    %v178 = vsel %vm175, %v152, 0
    %v180 = vsel %vm175, %v172, 0
    %v182 = vsel %vm175, %v174, 0
    %184 = vmatprep.subr.mxu0 0.0
    %185 = vmatpush1.xpose.msra.mxu0 %v180
    %186 = vmatprep.subr.mxu0 0.0
    %187 = vmatpush1.xpose.msra.mxu0 %v182
    %188 = vmatprep.subr.mxu0 0.0
    %189 = vmatpush1.xpose.msra.mxu0 0.0
    %190 = vmatprep.subr.mxu0 0.0
    %191 = vmatpush1.xpose.msra.mxu0 0.0
    %192 = vmatprep.subr.mxu0 0.0
    %193 = vmatpush1.xpose.msra.mxu0 0.0
    %194 = vmatprep.subr.mxu0 0.0
    %195 = vmatpush1.xpose.msra.mxu0 0.0
    %196 = vmatprep.subr.mxu0 0.0
    %197 = vmatpush1.xpose.msra.mxu0 0.0
    %198 = vmatprep.subr.mxu0 0.0
    %199 = vmatpush1.xpose.msra.mxu0 0.0
    %200 = vmatprep.subr.mxu0 0.0
    %201 = vmatpush1.xpose.msra.mxu0 0.0
    %202 = vmatprep.subr.mxu0 0.0
    %203 = vmatpush1.xpose.msra.mxu0 0.0
    %204 = vmatprep.subr.mxu0 0.0
    %205 = vmatpush1.xpose.msra.mxu0 0.0
    %206 = vmatprep.subr.mxu0 0.0
    %207 = vmatpush1.xpose.msra.mxu0 0.0
    %208 = vmatprep.subr.mxu0 0.0
    %209 = vmatpush1.xpose.msra.mxu0 0.0
    %210 = vmatprep.subr.mxu0 0.0
    %211 = vmatpush1.xpose.msra.mxu0 0.0
    %212 = vmatprep.subr.mxu0 0.0
    %213 = vmatpush1.xpose.msra.mxu0 0.0
    %214 = vmatprep.subr.mxu0 0.0
    %215 = vmatpush1.xpose.msra.mxu0 0.0
    %216 = vmatprep.subr.mxu0 0.0
    %217 = vmatpush1.xpose.msra.mxu0 0.0
    %218 = vmatprep.subr.mxu0 0.0
    %219 = vmatpush1.xpose.msra.mxu0 0.0
    %220 = vmatprep.subr.mxu0 0.0
    %221 = vmatpush1.xpose.msra.mxu0 0.0
    %222 = vmatprep.subr.mxu0 0.0
    %223 = vmatpush1.xpose.msra.mxu0 0.0
    %224 = vmatprep.subr.mxu0 0.0
    %225 = vmatpush1.xpose.msra.mxu0 0.0
    %226 = vmatprep.subr.mxu0 0.0
    %227 = vmatpush1.xpose.msra.mxu0 0.0
    %228 = vmatprep.subr.mxu0 0.0
    %229 = vmatpush1.xpose.msra.mxu0 0.0
    %230 = vmatprep.subr.mxu0 0.0
    %231 = vmatpush1.xpose.msra.mxu0 0.0
    %232 = vmatprep.subr.mxu0 0.0
    %233 = vmatpush1.xpose.msra.mxu0 0.0
    %234 = vmatprep.subr.mxu0 0.0
    %235 = vmatpush1.xpose.msra.mxu0 0.0
    %236 = vmatprep.subr.mxu0 0.0
    %237 = vmatpush1.xpose.msra.mxu0 0.0
    %238 = vmatprep.subr.mxu0 0.0
    %239 = vmatpush1.xpose.msra.mxu0 0.0
    %240 = vmatprep.subr.mxu0 0.0
    %241 = vmatpush1.xpose.msra.mxu0 0.0
    %242 = vmatprep.subr.mxu0 0.0
    %243 = vmatpush1.xpose.msra.mxu0 0.0
    %244 = vmatprep.subr.mxu0 0.0
    %245 = vmatpush1.xpose.msra.mxu0 0.0
    %246 = vmatprep.subr.mxu0 0.0
    %247 = vmatpush1.xpose.msra.mxu0 0.0
    %248 = vmatprep.mubr.f32.mxu0 0.0
    %249 = vmatmul.mubr.f32.gmra.mrb[0].mxu0 %v176
    %v250 = vpop.f32.mrb[0].mxu0
    %v251 = vadd.f32 %v169, %v250
    %v252 = vpop.f32.mrb[0].mxu0
    %253 = vmatprep.mubr.f32.mxu0 0.0
    %254 = vmatmul.mubr.f32.gmra.mrb[0].mxu0 %v178
    %v255 = vpop.f32.mrb[0].mxu0
    %v256 = vadd.f32 %v170, %v255
    %v257 = vpop.f32.mrb[0].mxu0
    %258 = vdwg.mxu0
    %259 = vrot.lane.b32.xlu0 %v158, 96
    %v260 = vpop.permute.xlu0 %259
    %261 = vrot.lane.b32.xlu0 %v160, 96
    %v262 = vpop.permute.xlu0 %261
    %v263 = vsel %vm175, %v158, 0
    %v265 = vsel %vm175, %v160, 0
    %v267 = vsel %vm175, %v260, 0
    %v269 = vsel %vm175, %v262, 0
    %271 = vmatprep.subr.mxu0 0.0
    %272 = vmatpush1.xpose.msra.mxu0 %v267
    %273 = vmatprep.subr.mxu0 0.0
    %274 = vmatpush1.xpose.msra.mxu0 %v269
    %275 = vmatprep.subr.mxu0 0.0
    %276 = vmatpush1.xpose.msra.mxu0 0.0
    %277 = vmatprep.subr.mxu0 0.0
    %278 = vmatpush1.xpose.msra.mxu0 0.0
    %279 = vmatprep.subr.mxu0 0.0
    %280 = vmatpush1.xpose.msra.mxu0 0.0
    %281 = vmatprep.subr.mxu0 0.0
    %282 = vmatpush1.xpose.msra.mxu0 0.0
    %283 = vmatprep.subr.mxu0 0.0
    %284 = vmatpush1.xpose.msra.mxu0 0.0
    %285 = vmatprep.subr.mxu0 0.0
    %286 = vmatpush1.xpose.msra.mxu0 0.0
    %287 = vmatprep.subr.mxu0 0.0
    %288 = vmatpush1.xpose.msra.mxu0 0.0
    %289 = vmatprep.subr.mxu0 0.0
    %290 = vmatpush1.xpose.msra.mxu0 0.0
    %291 = vmatprep.subr.mxu0 0.0
    %292 = vmatpush1.xpose.msra.mxu0 0.0
    %293 = vmatprep.subr.mxu0 0.0
    %294 = vmatpush1.xpose.msra.mxu0 0.0
    %295 = vmatprep.subr.mxu0 0.0
    %296 = vmatpush1.xpose.msra.mxu0 0.0
    %297 = vmatprep.subr.mxu0 0.0
    %298 = vmatpush1.xpose.msra.mxu0 0.0
    %299 = vmatprep.subr.mxu0 0.0
    %300 = vmatpush1.xpose.msra.mxu0 0.0
    %301 = vmatprep.subr.mxu0 0.0
    %302 = vmatpush1.xpose.msra.mxu0 0.0
    %303 = vmatprep.subr.mxu0 0.0
    %304 = vmatpush1.xpose.msra.mxu0 0.0
    %305 = vmatprep.subr.mxu0 0.0
    %306 = vmatpush1.xpose.msra.mxu0 0.0
    %307 = vmatprep.subr.mxu0 0.0
    %308 = vmatpush1.xpose.msra.mxu0 0.0
    %309 = vmatprep.subr.mxu0 0.0
    %310 = vmatpush1.xpose.msra.mxu0 0.0
    %311 = vmatprep.subr.mxu0 0.0
    %312 = vmatpush1.xpose.msra.mxu0 0.0
    %313 = vmatprep.subr.mxu0 0.0
    %314 = vmatpush1.xpose.msra.mxu0 0.0
    %315 = vmatprep.subr.mxu0 0.0
    %316 = vmatpush1.xpose.msra.mxu0 0.0
    %317 = vmatprep.subr.mxu0 0.0
    %318 = vmatpush1.xpose.msra.mxu0 0.0
    %319 = vmatprep.subr.mxu0 0.0
    %320 = vmatpush1.xpose.msra.mxu0 0.0
    %321 = vmatprep.subr.mxu0 0.0
    %322 = vmatpush1.xpose.msra.mxu0 0.0
    %323 = vmatprep.subr.mxu0 0.0
    %324 = vmatpush1.xpose.msra.mxu0 0.0
    %325 = vmatprep.subr.mxu0 0.0
    %326 = vmatpush1.xpose.msra.mxu0 0.0
    %327 = vmatprep.subr.mxu0 0.0
    %328 = vmatpush1.xpose.msra.mxu0 0.0
    %329 = vmatprep.subr.mxu0 0.0
    %330 = vmatpush1.xpose.msra.mxu0 0.0
    %331 = vmatprep.subr.mxu0 0.0
    %332 = vmatpush1.xpose.msra.mxu0 0.0
    %333 = vmatprep.subr.mxu0 0.0
    %334 = vmatpush1.xpose.msra.mxu0 0.0
    %335 = vmatprep.mubr.f32.mxu0 0.0
    %336 = vmatmul.mubr.f32.gmra.mrb[0].mxu0 %v263
    %v337 = vpop.f32.mrb[0].mxu0
    %v338 = vadd.f32 %v169, %v337
    %v339 = vpop.f32.mrb[0].mxu0
    %340 = vmatprep.mubr.f32.mxu0 0.0
    %341 = vmatmul.mubr.f32.gmra.mrb[0].mxu0 %v265
    %v342 = vpop.f32.mrb[0].mxu0
    %v343 = vadd.f32 %v170, %v342
    %v344 = vpop.f32.mrb[0].mxu0
    %345 = vdwg.mxu0
    %346 = vrot.lane.b32.xlu0 %v162, 96
    %v347 = vpop.permute.xlu0 %346
    %348 = vrot.lane.b32.xlu0 %v164, 96
    %v349 = vpop.permute.xlu0 %348
    %v350 = vsel %vm175, %v162, 0
    %v352 = vsel %vm175, %v164, 0
    %v354 = vsel %vm175, %v347, 0
    %v356 = vsel %vm175, %v349, 0
    %358 = vmatprep.subr.mxu0 0.0
    %359 = vmatpush1.xpose.msra.mxu0 %v354
    %360 = vmatprep.subr.mxu0 0.0
    %361 = vmatpush1.xpose.msra.mxu0 %v356
    %362 = vmatprep.subr.mxu0 0.0
    %363 = vmatpush1.xpose.msra.mxu0 0.0
    %364 = vmatprep.subr.mxu0 0.0
    %365 = vmatpush1.xpose.msra.mxu0 0.0
    %366 = vmatprep.subr.mxu0 0.0
    %367 = vmatpush1.xpose.msra.mxu0 0.0
    %368 = vmatprep.subr.mxu0 0.0
    %369 = vmatpush1.xpose.msra.mxu0 0.0
    %370 = vmatprep.subr.mxu0 0.0
    %371 = vmatpush1.xpose.msra.mxu0 0.0
    %372 = vmatprep.subr.mxu0 0.0
    %373 = vmatpush1.xpose.msra.mxu0 0.0
    %374 = vmatprep.subr.mxu0 0.0
    %375 = vmatpush1.xpose.msra.mxu0 0.0
    %376 = vmatprep.subr.mxu0 0.0
    %377 = vmatpush1.xpose.msra.mxu0 0.0
    %378 = vmatprep.subr.mxu0 0.0
    %379 = vmatpush1.xpose.msra.mxu0 0.0
    %380 = vmatprep.subr.mxu0 0.0
    %381 = vmatpush1.xpose.msra.mxu0 0.0
    %382 = vmatprep.subr.mxu0 0.0
    %383 = vmatpush1.xpose.msra.mxu0 0.0
    %384 = vmatprep.subr.mxu0 0.0
    %385 = vmatpush1.xpose.msra.mxu0 0.0
    %386 = vmatprep.subr.mxu0 0.0
    %387 = vmatpush1.xpose.msra.mxu0 0.0
    %388 = vmatprep.subr.mxu0 0.0
    %389 = vmatpush1.xpose.msra.mxu0 0.0
    %390 = vmatprep.subr.mxu0 0.0
    %391 = vmatpush1.xpose.msra.mxu0 0.0
    %392 = vmatprep.subr.mxu0 0.0
    %393 = vmatpush1.xpose.msra.mxu0 0.0
    %394 = vmatprep.subr.mxu0 0.0
    %395 = vmatpush1.xpose.msra.mxu0 0.0
    %396 = vmatprep.subr.mxu0 0.0
    %397 = vmatpush1.xpose.msra.mxu0 0.0
    %398 = vmatprep.subr.mxu0 0.0
    %399 = vmatpush1.xpose.msra.mxu0 0.0
    %400 = vmatprep.subr.mxu0 0.0
    %401 = vmatpush1.xpose.msra.mxu0 0.0
    %402 = vmatprep.subr.mxu0 0.0
    %403 = vmatpush1.xpose.msra.mxu0 0.0
    %404 = vmatprep.subr.mxu0 0.0
    %405 = vmatpush1.xpose.msra.mxu0 0.0
    %406 = vmatprep.subr.mxu0 0.0
    %407 = vmatpush1.xpose.msra.mxu0 0.0
    %408 = vmatprep.subr.mxu0 0.0
    %409 = vmatpush1.xpose.msra.mxu0 0.0
    %410 = vmatprep.subr.mxu0 0.0
    %411 = vmatpush1.xpose.msra.mxu0 0.0
    %412 = vmatprep.subr.mxu0 0.0
    %413 = vmatpush1.xpose.msra.mxu0 0.0
    %414 = vmatprep.subr.mxu0 0.0
    %415 = vmatpush1.xpose.msra.mxu0 0.0
    %416 = vmatprep.subr.mxu0 0.0
    %417 = vmatpush1.xpose.msra.mxu0 0.0
    %418 = vmatprep.subr.mxu0 0.0
    %419 = vmatpush1.xpose.msra.mxu0 0.0
    %420 = vmatprep.subr.mxu0 0.0
    %421 = vmatpush1.xpose.msra.mxu0 0.0
    %422 = vmatprep.mubr.f32.mxu0 0.0
    %423 = vmatmul.mubr.f32.gmra.mrb[0].mxu0 %v350
    %v424 = vpop.f32.mrb[0].mxu0
    %v425 = vadd.f32 %v169, %v424
    %v426 = vpop.f32.mrb[0].mxu0
    %427 = vmatprep.mubr.f32.mxu0 0.0
    %428 = vmatmul.mubr.f32.gmra.mrb[0].mxu0 %v352
    %v429 = vpop.f32.mrb[0].mxu0
    %v430 = vadd.f32 %v170, %v429
    %v431 = vpop.f32.mrb[0].mxu0
    %432 = vdwg.mxu0
    %433 = vrot.lane.b32.xlu0 %v166, 96
    %v434 = vpop.permute.xlu0 %433
    %435 = vrot.lane.b32.xlu0 %v168, 96
    %v436 = vpop.permute.xlu0 %435
    %v437 = vsel %vm175, %v166, 0
    %v439 = vsel %vm175, %v168, 0
    %v441 = vsel %vm175, %v434, 0
    %v443 = vsel %vm175, %v436, 0
    %445 = vmatprep.subr.mxu0 0.0
    %446 = vmatpush1.xpose.msra.mxu0 %v441
    %447 = vmatprep.subr.mxu0 0.0
    %448 = vmatpush1.xpose.msra.mxu0 %v443
    %449 = vmatprep.subr.mxu0 0.0
    %450 = vmatpush1.xpose.msra.mxu0 0.0
    %451 = vmatprep.subr.mxu0 0.0
    %452 = vmatpush1.xpose.msra.mxu0 0.0
    %453 = vmatprep.subr.mxu0 0.0
    %454 = vmatpush1.xpose.msra.mxu0 0.0
    %455 = vmatprep.subr.mxu0 0.0
    %456 = vmatpush1.xpose.msra.mxu0 0.0
    %457 = vmatprep.subr.mxu0 0.0
    %458 = vmatpush1.xpose.msra.mxu0 0.0
    %459 = vmatprep.subr.mxu0 0.0
    %460 = vmatpush1.xpose.msra.mxu0 0.0
    %461 = vmatprep.subr.mxu0 0.0
    %462 = vmatpush1.xpose.msra.mxu0 0.0
    %463 = vmatprep.subr.mxu0 0.0
    %464 = vmatpush1.xpose.msra.mxu0 0.0
    %465 = vmatprep.subr.mxu0 0.0
    %466 = vmatpush1.xpose.msra.mxu0 0.0
    %467 = vmatprep.subr.mxu0 0.0
    %468 = vmatpush1.xpose.msra.mxu0 0.0
    %469 = vmatprep.subr.mxu0 0.0
    %470 = vmatpush1.xpose.msra.mxu0 0.0
    %471 = vmatprep.subr.mxu0 0.0
    %472 = vmatpush1.xpose.msra.mxu0 0.0
    %473 = vmatprep.subr.mxu0 0.0
    %474 = vmatpush1.xpose.msra.mxu0 0.0
    %475 = vmatprep.subr.mxu0 0.0
    %476 = vmatpush1.xpose.msra.mxu0 0.0
    %477 = vmatprep.subr.mxu0 0.0
    %478 = vmatpush1.xpose.msra.mxu0 0.0
    %479 = vmatprep.subr.mxu0 0.0
    %480 = vmatpush1.xpose.msra.mxu0 0.0
    %481 = vmatprep.subr.mxu0 0.0
    %482 = vmatpush1.xpose.msra.mxu0 0.0
    %483 = vmatprep.subr.mxu0 0.0
    %484 = vmatpush1.xpose.msra.mxu0 0.0
    %485 = vmatprep.subr.mxu0 0.0
    %486 = vmatpush1.xpose.msra.mxu0 0.0
    %487 = vmatprep.subr.mxu0 0.0
    %488 = vmatpush1.xpose.msra.mxu0 0.0
    %489 = vmatprep.subr.mxu0 0.0
    %490 = vmatpush1.xpose.msra.mxu0 0.0
    %491 = vmatprep.subr.mxu0 0.0
    %492 = vmatpush1.xpose.msra.mxu0 0.0
    %493 = vmatprep.subr.mxu0 0.0
    %494 = vmatpush1.xpose.msra.mxu0 0.0
    %495 = vmatprep.subr.mxu0 0.0
    %496 = vmatpush1.xpose.msra.mxu0 0.0
    %497 = vmatprep.subr.mxu0 0.0
    %498 = vmatpush1.xpose.msra.mxu0 0.0
    %499 = vmatprep.subr.mxu0 0.0
    %500 = vmatpush1.xpose.msra.mxu0 0.0
    %501 = vmatprep.subr.mxu0 0.0
    %502 = vmatpush1.xpose.msra.mxu0 0.0
    %503 = vmatprep.subr.mxu0 0.0
    %504 = vmatpush1.xpose.msra.mxu0 0.0
    %505 = vmatprep.subr.mxu0 0.0
    %506 = vmatpush1.xpose.msra.mxu0 0.0
    %507 = vmatprep.subr.mxu0 0.0
    %508 = vmatpush1.xpose.msra.mxu0 0.0
    %509 = vmatprep.mubr.f32.mxu0 0.0
    %510 = vmatmul.mubr.f32.gmra.mrb[0].mxu0 %v437
    %v511 = vpop.f32.mrb[0].mxu0
    %v512 = vadd.f32 %v169, %v511
    %v513 = vpop.f32.mrb[0].mxu0
    %514 = vmatprep.mubr.f32.mxu0 0.0
    %515 = vmatmul.mubr.f32.gmra.mrb[0].mxu0 %v439
    %v516 = vpop.f32.mrb[0].mxu0
    %v517 = vadd.f32 %v170, %v516
    %v518 = vpop.f32.mrb[0].mxu0
    %519 = vdwg.mxu0
    %vm520 = vcmask 130048
    %v521 = vsel %vm520, %v251, -inf
    %522 = vmax.xlane.f32.xlu0 %v521
    %v523 = vpop.xlane.xlu0 %522
    %v524 = vsel %vm520, %v256, -inf
    %525 = vmax.xlane.f32.xlu0 %v524
    %v526 = vpop.xlane.xlu0 %525
    %v527 = vsel %vm520, %v338, -inf
    %528 = vmax.xlane.f32.xlu0 %v527
    %v529 = vpop.xlane.xlu0 %528
    %v530 = vsel %vm520, %v343, -inf
    %531 = vmax.xlane.f32.xlu0 %v530
    %v532 = vpop.xlane.xlu0 %531
    %v533 = vsel %vm520, %v425, -inf
    %534 = vmax.xlane.f32.xlu0 %v533
    %v535 = vpop.xlane.xlu0 %534
    %v536 = vsel %vm520, %v430, -inf
    %537 = vmax.xlane.f32.xlu0 %v536
    %v538 = vpop.xlane.xlu0 %537
    %v539 = vsel %vm520, %v512, -inf
    %540 = vmax.xlane.f32.xlu0 %v539
    %v541 = vpop.xlane.xlu0 %540
    %v542 = vsel %vm520, %v517, -inf
    %543 = vmax.xlane.f32.xlu0 %v542
    %v544 = vpop.xlane.xlu0 %543
    %v545 = vsub.f32 %v251, %v523
    %v546 = vsub.f32 %v256, %v526
    %v547 = vsub.f32 %v338, %v529
    %v548 = vsub.f32 %v343, %v532
    %v549 = vsub.f32 %v425, %v535
    %v550 = vsub.f32 %v430, %v538
    %v551 = vsub.f32 %v512, %v541
    %v552 = vsub.f32 %v517, %v544
    %v553 = vmul.f32 %v545, 1.442695
    %v554 = vpow.pop %v553
    %v555 = vmul.f32 %v546, 1.442695
    %v556 = vpow.pop %v555
    %v557 = vmul.f32 %v547, 1.442695
    %v558 = vpow.pop %v557
    %v559 = vmul.f32 %v548, 1.442695
    %v560 = vpow.pop %v559
    %v561 = vmul.f32 %v549, 1.442695
    %v562 = vpow.pop %v561
    %v563 = vmul.f32 %v550, 1.442695
    %v564 = vpow.pop %v563
    %v565 = vmul.f32 %v551, 1.442695
    %v566 = vpow.pop %v565
    %v567 = vmul.f32 %v552, 1.442695
    %v568 = vpow.pop %v567
    %v569 = vsel %vm520, %v554, 0.0
    %570 = vadd.xlane.f32.xlu0 %v569
    %v571 = vpop.xlane.xlu0 %570
    %v572 = vsel %vm520, %v556, 0.0
    %573 = vadd.xlane.f32.xlu0 %v572
    %v574 = vpop.xlane.xlu0 %573
    %v575 = vsel %vm520, %v558, 0.0
    %576 = vadd.xlane.f32.xlu0 %v575
    %v577 = vpop.xlane.xlu0 %576
    %v578 = vsel %vm520, %v560, 0.0
    %579 = vadd.xlane.f32.xlu0 %v578
    %v580 = vpop.xlane.xlu0 %579
    %v581 = vsel %vm520, %v562, 0.0
    %582 = vadd.xlane.f32.xlu0 %v581
    %v583 = vpop.xlane.xlu0 %582
    %v584 = vsel %vm520, %v564, 0.0
    %585 = vadd.xlane.f32.xlu0 %v584
    %v586 = vpop.xlane.xlu0 %585
    %v587 = vsel %vm520, %v566, 0.0
    %588 = vadd.xlane.f32.xlu0 %v587
    %v589 = vpop.xlane.xlu0 %588
    %v590 = vsel %vm520, %v568, 0.0
    %591 = vadd.xlane.f32.xlu0 %v590
    %v592 = vpop.xlane.xlu0 %591
    %v593 = vrcp.pop %v571
    %v594 = vmul.f32 %v554, %v593
    %v595 = vrcp.pop %v574
    %v596 = vmul.f32 %v556, %v595
    %v597 = vrcp.pop %v577
    %v598 = vmul.f32 %v558, %v597
    %v599 = vrcp.pop %v580
    %v600 = vmul.f32 %v560, %v599
    %v601 = vrcp.pop %v583
    %v602 = vmul.f32 %v562, %v601
    %v603 = vrcp.pop %v586
    %v604 = vmul.f32 %v564, %v603
    %v605 = vrcp.pop %v589
    %v606 = vmul.f32 %v566, %v605
    %v607 = vrcp.pop %v592
    %v608 = vmul.f32 %v568, %v607
    %609 = vrot.lane.b32.xlu0 %v147, 64
    %v610 = vpop.permute.xlu0 %609
    %611 = vrot.lane.b32.xlu0 %v152, 64
    %v612 = vpop.permute.xlu0 %611
    %v616 = vsel %vm520, %v594, 0
    %v619 = vsel %vm520, %v596, 0
    %621 = vmatprep.subr.mxu0 0.0
    %622 = vmatpush1.msra.mxu0 %v610
    %623 = vmatprep.subr.mxu0 0.0
    %624 = vmatpush1.msra.mxu0 %v612
    %625 = vmatprep.subr.mxu0 0.0
    %626 = vmatpush1.msra.mxu0 0.0
    %627 = vmatprep.subr.mxu0 0.0
    %628 = vmatpush1.msra.mxu0 0.0
    %629 = vmatprep.subr.mxu0 0.0
    %630 = vmatpush1.msra.mxu0 0.0
    %631 = vmatprep.subr.mxu0 0.0
    %632 = vmatpush1.msra.mxu0 0.0
    %633 = vmatprep.subr.mxu0 0.0
    %634 = vmatpush1.msra.mxu0 0.0
    %635 = vmatprep.subr.mxu0 0.0
    %636 = vmatpush1.msra.mxu0 0.0
    %637 = vmatprep.subr.mxu0 0.0
    %638 = vmatpush1.msra.mxu0 0.0
    %639 = vmatprep.subr.mxu0 0.0
    %640 = vmatpush1.msra.mxu0 0.0
    %641 = vmatprep.subr.mxu0 0.0
    %642 = vmatpush1.msra.mxu0 0.0
    %643 = vmatprep.subr.mxu0 0.0
    %644 = vmatpush1.msra.mxu0 0.0
    %645 = vmatprep.subr.mxu0 0.0
    %646 = vmatpush1.msra.mxu0 0.0
    %647 = vmatprep.subr.mxu0 0.0
    %648 = vmatpush1.msra.mxu0 0.0
    %649 = vmatprep.subr.mxu0 0.0
    %650 = vmatpush1.msra.mxu0 0.0
    %651 = vmatprep.subr.mxu0 0.0
    %652 = vmatpush1.msra.mxu0 0.0
    %653 = vmatprep.subr.mxu0 0.0
    %654 = vmatpush1.msra.mxu0 0.0
    %655 = vmatprep.subr.mxu0 0.0
    %656 = vmatpush1.msra.mxu0 0.0
    %657 = vmatprep.subr.mxu0 0.0
    %658 = vmatpush1.msra.mxu0 0.0
    %659 = vmatprep.subr.mxu0 0.0
    %660 = vmatpush1.msra.mxu0 0.0
    %661 = vmatprep.subr.mxu0 0.0
    %662 = vmatpush1.msra.mxu0 0.0
    %663 = vmatprep.subr.mxu0 0.0
    %664 = vmatpush1.msra.mxu0 0.0
    %665 = vmatprep.subr.mxu0 0.0
    %666 = vmatpush1.msra.mxu0 0.0
    %667 = vmatprep.subr.mxu0 0.0
    %668 = vmatpush1.msra.mxu0 0.0
    %669 = vmatprep.subr.mxu0 0.0
    %670 = vmatpush1.msra.mxu0 0.0
    %671 = vmatprep.subr.mxu0 0.0
    %672 = vmatpush1.msra.mxu0 0.0
    %673 = vmatprep.subr.mxu0 0.0
    %674 = vmatpush1.msra.mxu0 0.0
    %675 = vmatprep.subr.mxu0 0.0
    %676 = vmatpush1.msra.mxu0 0.0
    %677 = vmatprep.subr.mxu0 0.0
    %678 = vmatpush1.msra.mxu0 0.0
    %679 = vmatprep.subr.mxu0 0.0
    %680 = vmatpush1.msra.mxu0 0.0
    %681 = vmatprep.subr.mxu0 0.0
    %682 = vmatpush1.msra.mxu0 0.0
    %683 = vmatprep.subr.mxu0 0.0
    %684 = vmatpush1.msra.mxu0 0.0
    %685 = vmatprep.mubr.f32.mxu0 0.0
    %686 = vmatmul.mubr.f32.gmra.mrb[0].mxu0 %v616
    %v687 = vpop.f32.mrb[0].mxu0
    %v688 = vadd.f32 0.0, %v687
    %v689 = vpop.f32.mrb[0].mxu0
    %690 = vmatprep.mubr.f32.mxu0 0.0
    %691 = vmatmul.mubr.f32.gmra.mrb[0].mxu0 %v619
    %v692 = vpop.f32.mrb[0].mxu0
    %v693 = vadd.f32 0.0, %v692
    %v694 = vpop.f32.mrb[0].mxu0
    %695 = vdwg.mxu0
    %696 = vrot.lane.b32.xlu0 %v158, 64
    %v697 = vpop.permute.xlu0 %696
    %698 = vrot.lane.b32.xlu0 %v160, 64
    %v699 = vpop.permute.xlu0 %698
    %v703 = vsel %vm520, %v598, 0
    %v706 = vsel %vm520, %v600, 0
    %708 = vmatprep.subr.mxu0 0.0
    %709 = vmatpush1.msra.mxu0 %v697
    %710 = vmatprep.subr.mxu0 0.0
    %711 = vmatpush1.msra.mxu0 %v699
    %712 = vmatprep.subr.mxu0 0.0
    %713 = vmatpush1.msra.mxu0 0.0
    %714 = vmatprep.subr.mxu0 0.0
    %715 = vmatpush1.msra.mxu0 0.0
    %716 = vmatprep.subr.mxu0 0.0
    %717 = vmatpush1.msra.mxu0 0.0
    %718 = vmatprep.subr.mxu0 0.0
    %719 = vmatpush1.msra.mxu0 0.0
    %720 = vmatprep.subr.mxu0 0.0
    %721 = vmatpush1.msra.mxu0 0.0
    %722 = vmatprep.subr.mxu0 0.0
    %723 = vmatpush1.msra.mxu0 0.0
    %724 = vmatprep.subr.mxu0 0.0
    %725 = vmatpush1.msra.mxu0 0.0
    %726 = vmatprep.subr.mxu0 0.0
    %727 = vmatpush1.msra.mxu0 0.0
    %728 = vmatprep.subr.mxu0 0.0
    %729 = vmatpush1.msra.mxu0 0.0
    %730 = vmatprep.subr.mxu0 0.0
    %731 = vmatpush1.msra.mxu0 0.0
    %732 = vmatprep.subr.mxu0 0.0
    %733 = vmatpush1.msra.mxu0 0.0
    %734 = vmatprep.subr.mxu0 0.0
    %735 = vmatpush1.msra.mxu0 0.0
    %736 = vmatprep.subr.mxu0 0.0
    %737 = vmatpush1.msra.mxu0 0.0
    %738 = vmatprep.subr.mxu0 0.0
    %739 = vmatpush1.msra.mxu0 0.0
    %740 = vmatprep.subr.mxu0 0.0
    %741 = vmatpush1.msra.mxu0 0.0
    %742 = vmatprep.subr.mxu0 0.0
    %743 = vmatpush1.msra.mxu0 0.0
    %744 = vmatprep.subr.mxu0 0.0
    %745 = vmatpush1.msra.mxu0 0.0
    %746 = vmatprep.subr.mxu0 0.0
    %747 = vmatpush1.msra.mxu0 0.0
    %748 = vmatprep.subr.mxu0 0.0
    %749 = vmatpush1.msra.mxu0 0.0
    %750 = vmatprep.subr.mxu0 0.0
    %751 = vmatpush1.msra.mxu0 0.0
    %752 = vmatprep.subr.mxu0 0.0
    %753 = vmatpush1.msra.mxu0 0.0
    %754 = vmatprep.subr.mxu0 0.0
    %755 = vmatpush1.msra.mxu0 0.0
    %756 = vmatprep.subr.mxu0 0.0
    %757 = vmatpush1.msra.mxu0 0.0
    %758 = vmatprep.subr.mxu0 0.0
    %759 = vmatpush1.msra.mxu0 0.0
    %760 = vmatprep.subr.mxu0 0.0
    %761 = vmatpush1.msra.mxu0 0.0
    %762 = vmatprep.subr.mxu0 0.0
    %763 = vmatpush1.msra.mxu0 0.0
    %764 = vmatprep.subr.mxu0 0.0
    %765 = vmatpush1.msra.mxu0 0.0
    %766 = vmatprep.subr.mxu0 0.0
    %767 = vmatpush1.msra.mxu0 0.0
    %768 = vmatprep.subr.mxu0 0.0
    %769 = vmatpush1.msra.mxu0 0.0
    %770 = vmatprep.subr.mxu0 0.0
    %771 = vmatpush1.msra.mxu0 0.0
    %772 = vmatprep.mubr.f32.mxu0 0.0
    %773 = vmatmul.mubr.f32.gmra.mrb[0].mxu0 %v703
    %v774 = vpop.f32.mrb[0].mxu0
    %v775 = vadd.f32 0.0, %v774
    %v776 = vpop.f32.mrb[0].mxu0
    %777 = vmatprep.mubr.f32.mxu0 0.0
    %778 = vmatmul.mubr.f32.gmra.mrb[0].mxu0 %v706
    %v779 = vpop.f32.mrb[0].mxu0
    %v780 = vadd.f32 0.0, %v779
    %v781 = vpop.f32.mrb[0].mxu0
    %782 = vdwg.mxu0
    %783 = vrot.lane.b32.xlu0 %v162, 64
    %v784 = vpop.permute.xlu0 %783
    %785 = vrot.lane.b32.xlu0 %v164, 64
    %v786 = vpop.permute.xlu0 %785
    %v790 = vsel %vm520, %v602, 0
    %v793 = vsel %vm520, %v604, 0
    %795 = vmatprep.subr.mxu0 0.0
    %796 = vmatpush1.msra.mxu0 %v784
    %797 = vmatprep.subr.mxu0 0.0
    %798 = vmatpush1.msra.mxu0 %v786
    %799 = vmatprep.subr.mxu0 0.0
    %800 = vmatpush1.msra.mxu0 0.0
    %801 = vmatprep.subr.mxu0 0.0
    %802 = vmatpush1.msra.mxu0 0.0
    %803 = vmatprep.subr.mxu0 0.0
    %804 = vmatpush1.msra.mxu0 0.0
    %805 = vmatprep.subr.mxu0 0.0
    %806 = vmatpush1.msra.mxu0 0.0
    %807 = vmatprep.subr.mxu0 0.0
    %808 = vmatpush1.msra.mxu0 0.0
    %809 = vmatprep.subr.mxu0 0.0
    %810 = vmatpush1.msra.mxu0 0.0
    %811 = vmatprep.subr.mxu0 0.0
    %812 = vmatpush1.msra.mxu0 0.0
    %813 = vmatprep.subr.mxu0 0.0
    %814 = vmatpush1.msra.mxu0 0.0
    %815 = vmatprep.subr.mxu0 0.0
    %816 = vmatpush1.msra.mxu0 0.0
    %817 = vmatprep.subr.mxu0 0.0
    %818 = vmatpush1.msra.mxu0 0.0
    %819 = vmatprep.subr.mxu0 0.0
    %820 = vmatpush1.msra.mxu0 0.0
    %821 = vmatprep.subr.mxu0 0.0
    %822 = vmatpush1.msra.mxu0 0.0
    %823 = vmatprep.subr.mxu0 0.0
    %824 = vmatpush1.msra.mxu0 0.0
    %825 = vmatprep.subr.mxu0 0.0
    %826 = vmatpush1.msra.mxu0 0.0
    %827 = vmatprep.subr.mxu0 0.0
    %828 = vmatpush1.msra.mxu0 0.0
    %829 = vmatprep.subr.mxu0 0.0
    %830 = vmatpush1.msra.mxu0 0.0
    %831 = vmatprep.subr.mxu0 0.0
    %832 = vmatpush1.msra.mxu0 0.0
    %833 = vmatprep.subr.mxu0 0.0
    %834 = vmatpush1.msra.mxu0 0.0
    %835 = vmatprep.subr.mxu0 0.0
    %836 = vmatpush1.msra.mxu0 0.0
    %837 = vmatprep.subr.mxu0 0.0
    %838 = vmatpush1.msra.mxu0 0.0
    %839 = vmatprep.subr.mxu0 0.0
    %840 = vmatpush1.msra.mxu0 0.0
    %841 = vmatprep.subr.mxu0 0.0
    %842 = vmatpush1.msra.mxu0 0.0
    %843 = vmatprep.subr.mxu0 0.0
    %844 = vmatpush1.msra.mxu0 0.0
    %845 = vmatprep.subr.mxu0 0.0
    %846 = vmatpush1.msra.mxu0 0.0
    %847 = vmatprep.subr.mxu0 0.0
    %848 = vmatpush1.msra.mxu0 0.0
    %849 = vmatprep.subr.mxu0 0.0
    %850 = vmatpush1.msra.mxu0 0.0
    %851 = vmatprep.subr.mxu0 0.0
    %852 = vmatpush1.msra.mxu0 0.0
    %853 = vmatprep.subr.mxu0 0.0
    %854 = vmatpush1.msra.mxu0 0.0
    %855 = vmatprep.subr.mxu0 0.0
    %856 = vmatpush1.msra.mxu0 0.0
    %857 = vmatprep.subr.mxu0 0.0
    %858 = vmatpush1.msra.mxu0 0.0
    %859 = vmatprep.mubr.f32.mxu0 0.0
    %860 = vmatmul.mubr.f32.gmra.mrb[0].mxu0 %v790
    %v861 = vpop.f32.mrb[0].mxu0
    %v862 = vadd.f32 0.0, %v861
    %v863 = vpop.f32.mrb[0].mxu0
    %864 = vmatprep.mubr.f32.mxu0 0.0
    %865 = vmatmul.mubr.f32.gmra.mrb[0].mxu0 %v793
    %v866 = vpop.f32.mrb[0].mxu0
    %v867 = vadd.f32 0.0, %v866
    %v868 = vpop.f32.mrb[0].mxu0
    %869 = vdwg.mxu0
    %870 = vrot.lane.b32.xlu0 %v166, 64
    %v871 = vpop.permute.xlu0 %870
    %872 = vrot.lane.b32.xlu0 %v168, 64
    %v873 = vpop.permute.xlu0 %872
    %v877 = vsel %vm520, %v606, 0
    %v880 = vsel %vm520, %v608, 0
    %882 = vmatprep.subr.mxu0 0.0
    %883 = vmatpush1.msra.mxu0 %v871
    %884 = vmatprep.subr.mxu0 0.0
    %885 = vmatpush1.msra.mxu0 %v873
    %886 = vmatprep.subr.mxu0 0.0
    %887 = vmatpush1.msra.mxu0 0.0
    %888 = vmatprep.subr.mxu0 0.0
    %889 = vmatpush1.msra.mxu0 0.0
    %890 = vmatprep.subr.mxu0 0.0
    %891 = vmatpush1.msra.mxu0 0.0
    %892 = vmatprep.subr.mxu0 0.0
    %893 = vmatpush1.msra.mxu0 0.0
    %894 = vmatprep.subr.mxu0 0.0
    %895 = vmatpush1.msra.mxu0 0.0
    %896 = vmatprep.subr.mxu0 0.0
    %897 = vmatpush1.msra.mxu0 0.0
    %898 = vmatprep.subr.mxu0 0.0
    %899 = vmatpush1.msra.mxu0 0.0
    %900 = vmatprep.subr.mxu0 0.0
    %901 = vmatpush1.msra.mxu0 0.0
    %902 = vmatprep.subr.mxu0 0.0
    %903 = vmatpush1.msra.mxu0 0.0
    %904 = vmatprep.subr.mxu0 0.0
    %905 = vmatpush1.msra.mxu0 0.0
    %906 = vmatprep.subr.mxu0 0.0
    %907 = vmatpush1.msra.mxu0 0.0
    %908 = vmatprep.subr.mxu0 0.0
    %909 = vmatpush1.msra.mxu0 0.0
    %910 = vmatprep.subr.mxu0 0.0
    %911 = vmatpush1.msra.mxu0 0.0
    %912 = vmatprep.subr.mxu0 0.0
    %913 = vmatpush1.msra.mxu0 0.0
    %914 = vmatprep.subr.mxu0 0.0
    %915 = vmatpush1.msra.mxu0 0.0
    %916 = vmatprep.subr.mxu0 0.0
    %917 = vmatpush1.msra.mxu0 0.0
    %918 = vmatprep.subr.mxu0 0.0
    %919 = vmatpush1.msra.mxu0 0.0
    %920 = vmatprep.subr.mxu0 0.0
    %921 = vmatpush1.msra.mxu0 0.0
    %922 = vmatprep.subr.mxu0 0.0
    %923 = vmatpush1.msra.mxu0 0.0
    %924 = vmatprep.subr.mxu0 0.0
    %925 = vmatpush1.msra.mxu0 0.0
    %926 = vmatprep.subr.mxu0 0.0
    %927 = vmatpush1.msra.mxu0 0.0
    %928 = vmatprep.subr.mxu0 0.0
    %929 = vmatpush1.msra.mxu0 0.0
    %930 = vmatprep.subr.mxu0 0.0
    %931 = vmatpush1.msra.mxu0 0.0
    %932 = vmatprep.subr.mxu0 0.0
    %933 = vmatpush1.msra.mxu0 0.0
    %934 = vmatprep.subr.mxu0 0.0
    %935 = vmatpush1.msra.mxu0 0.0
    %936 = vmatprep.subr.mxu0 0.0
    %937 = vmatpush1.msra.mxu0 0.0
    %938 = vmatprep.subr.mxu0 0.0
    %939 = vmatpush1.msra.mxu0 0.0
    %940 = vmatprep.subr.mxu0 0.0
    %941 = vmatpush1.msra.mxu0 0.0
    %942 = vmatprep.subr.mxu0 0.0
    %943 = vmatpush1.msra.mxu0 0.0
    %944 = vmatprep.subr.mxu0 0.0
    %945 = vmatpush1.msra.mxu0 0.0
    %946 = vmatprep.mubr.f32.mxu0 0.0
    %947 = vmatmul.mubr.f32.gmra.mrb[0].mxu0 %v877
    %v948 = vpop.f32.mrb[0].mxu0
    %v949 = vadd.f32 0.0, %v948
    %v950 = vpop.f32.mrb[0].mxu0
    %951 = vmatprep.mubr.f32.mxu0 0.0
    %952 = vmatmul.mubr.f32.gmra.mrb[0].mxu0 %v880
    %v953 = vpop.f32.mrb[0].mxu0
    %v954 = vadd.f32 0.0, %v953
    %v955 = vpop.f32.mrb[0].mxu0
    %956 = vdwg.mxu0
    %959 = vrot.lane.b32.xlu0 %v775, 8
    %v960 = vpop.permute.xlu0 %959
    %961 = vrot.lane.b32.xlu0 %v780, 8
    %v962 = vpop.permute.xlu0 %961
    %967 = vrot.lane.b32.xlu0 %v862, 16
    %v968 = vpop.permute.xlu0 %967
    %969 = vrot.lane.b32.xlu0 %v867, 16
    %v970 = vpop.permute.xlu0 %969
    %975 = vrot.lane.b32.xlu0 %v949, 24
    %v976 = vpop.permute.xlu0 %975
    %977 = vrot.lane.b32.xlu0 %v954, 24
    %v978 = vpop.permute.xlu0 %977
    %v981 = vsel %vm175, %v688, %v960
    %v982 = vsel %vm175, %v693, %v962
    %v983 = vsel %vm520, %v981, %v968
    %v984 = vsel %vm520, %v982, %v970
    %vm985 = vcmask 195584
    %v986 = vsel %vm985, %v983, %v976
    %v987 = vsel %vm985, %v984, %v978
    %v988 = vld [vmem:[%s4] sm:$0xff]
    %v989 = vld [vmem:[%s4 + $0x8] sm:$0xff]
    %v990 = vld [vmem:[%s4 + $0x10] sm:$0xff]
    %v991 = vld [vmem:[%s4 + $0x18] sm:$0xff]
    %v992 = vld [vmem:[%s5] sm:$0x1]
    %v994 = vlaneseq
    %v995 = vshrl.u32 %v994, 7
    %v996 = vsub.s32 0, %v995
    %v997 = vrot.slane %v992, %v996
    %v1000 = vsel %vm73, %v986, 0
    %v1003 = vsel %vm73, %v987, 0
    %1005 = vmatprep.subr.mxu0 0.0
    %1006 = vmatpush1.msra.mxu0 %v988
    %1007 = vmatprep.subr.mxu0 0.0
    %1008 = vmatpush1.msra.mxu0 %v989
    %1009 = vmatprep.subr.mxu0 0.0
    %1010 = vmatpush1.msra.mxu0 %v990
    %1011 = vmatprep.subr.mxu0 0.0
    %1012 = vmatpush1.msra.mxu0 %v991
    %1013 = vmatprep.subr.mxu0 0.0
    %1014 = vmatpush1.msra.mxu0 0.0
    %1015 = vmatprep.subr.mxu0 0.0
    %1016 = vmatpush1.msra.mxu0 0.0
    %1017 = vmatprep.subr.mxu0 0.0
    %1018 = vmatpush1.msra.mxu0 0.0
    %1019 = vmatprep.subr.mxu0 0.0
    %1020 = vmatpush1.msra.mxu0 0.0
    %1021 = vmatprep.subr.mxu0 0.0
    %1022 = vmatpush1.msra.mxu0 0.0
    %1023 = vmatprep.subr.mxu0 0.0
    %1024 = vmatpush1.msra.mxu0 0.0
    %1025 = vmatprep.subr.mxu0 0.0
    %1026 = vmatpush1.msra.mxu0 0.0
    %1027 = vmatprep.subr.mxu0 0.0
    %1028 = vmatpush1.msra.mxu0 0.0
    %1029 = vmatprep.subr.mxu0 0.0
    %1030 = vmatpush1.msra.mxu0 0.0
    %1031 = vmatprep.subr.mxu0 0.0
    %1032 = vmatpush1.msra.mxu0 0.0
    %1033 = vmatprep.subr.mxu0 0.0
    %1034 = vmatpush1.msra.mxu0 0.0
    %1035 = vmatprep.subr.mxu0 0.0
    %1036 = vmatpush1.msra.mxu0 0.0
    %1037 = vmatprep.subr.mxu0 0.0
    %1038 = vmatpush1.msra.mxu0 0.0
    %1039 = vmatprep.subr.mxu0 0.0
    %1040 = vmatpush1.msra.mxu0 0.0
    %1041 = vmatprep.subr.mxu0 0.0
    %1042 = vmatpush1.msra.mxu0 0.0
    %1043 = vmatprep.subr.mxu0 0.0
    %1044 = vmatpush1.msra.mxu0 0.0
    %1045 = vmatprep.subr.mxu0 0.0
    %1046 = vmatpush1.msra.mxu0 0.0
    %1047 = vmatprep.subr.mxu0 0.0
    %1048 = vmatpush1.msra.mxu0 0.0
    %1049 = vmatprep.subr.mxu0 0.0
    %1050 = vmatpush1.msra.mxu0 0.0
    %1051 = vmatprep.subr.mxu0 0.0
    %1052 = vmatpush1.msra.mxu0 0.0
    %1053 = vmatprep.subr.mxu0 0.0
    %1054 = vmatpush1.msra.mxu0 0.0
    %1055 = vmatprep.subr.mxu0 0.0
    %1056 = vmatpush1.msra.mxu0 0.0
    %1057 = vmatprep.subr.mxu0 0.0
    %1058 = vmatpush1.msra.mxu0 0.0
    %1059 = vmatprep.subr.mxu0 0.0
    %1060 = vmatpush1.msra.mxu0 0.0
    %1061 = vmatprep.subr.mxu0 0.0
    %1062 = vmatpush1.msra.mxu0 0.0
    %1063 = vmatprep.subr.mxu0 0.0
    %1064 = vmatpush1.msra.mxu0 0.0
    %1065 = vmatprep.subr.mxu0 0.0
    %1066 = vmatpush1.msra.mxu0 0.0
    %1067 = vmatprep.subr.mxu0 0.0
    %1068 = vmatpush1.msra.mxu0 0.0
    %1069 = vmatprep.mubr.f32.mxu0 0.0
    %1070 = vmatmul.mubr.f32.gmra.mrb[0].mxu0 %v1000
    %v1071 = vpop.f32.mrb[0].mxu0
    %v1072 = vadd.f32 %v997, %v1071
    %v1073 = vpop.f32.mrb[0].mxu0
    %1074 = vmatprep.mubr.f32.mxu0 0.0
    %1075 = vmatmul.mubr.f32.gmra.mrb[0].mxu0 %v1003
    %v1076 = vpop.f32.mrb[0].mxu0
    %v1077 = vadd.f32 %v997, %v1076
    %v1078 = vpop.f32.mrb[0].mxu0
    %1079 = vdwg.mxu0
    %v1080 = vld [vmem:[%s6] sm:$0x1]
    %v1082 = vlaneseq
    %v1083 = vshrl.u32 %v1082, 7
    %v1084 = vsub.s32 0, %v1083
    %v1085 = vrot.slane %v1080, %v1084
    %v1087 = vld [vmem:[%s7] sm:$0x1]
    %v1089 = vlaneseq
    %v1090 = vshrl.u32 %v1089, 7
    %v1091 = vsub.s32 0, %v1090
    %v1092 = vrot.slane %v1087, %v1091
    %v1094 = vld [vmem:[%s12] sm:$0x1]
    %v1096 = vlaneseq
    %v1097 = vshrl.u32 %v1096, 7
    %v1098 = vsub.s32 0, %v1097
    %v1099 = vrot.slane %v1094, %v1098
    %v1101 = vld [vmem:[%s13] sm:$0x1]
    %v1103 = vlaneseq
    %v1104 = vshrl.u32 %v1103, 7
    %v1105 = vsub.s32 0, %v1104
    %v1106 = vrot.slane %v1101, %v1105
    %v1108 = vadd.f32 %v60, %v1072
    %v1109 = vadd.f32 %v61, %v1077
    %v1110 = vsel %vm73, %v1108, 0.0
    %1111 = vadd.xlane.f32.xlu0 %v1110
    %v1112 = vpop.xlane.xlu0 %1111
    %v1113 = vsel %vm73, %v1109, 0.0
    %1114 = vadd.xlane.f32.xlu0 %v1113
    %v1115 = vpop.xlane.xlu0 %1114
    %v1116 = vrcp.pop 32.0
    %v1117 = vmul.f32 %v1112, %v1116
    %v1118 = vmul.f32 %v1115, %v1116
    %v1119 = vsub.f32 %v1108, %v1117
    %v1120 = vsub.f32 %v1109, %v1118
    %v1121 = vmul.f32 %v1119, %v1119
    %v1122 = vmul.f32 %v1120, %v1120
    %v1123 = vsel %vm73, %v1121, 0.0
    %1124 = vadd.xlane.f32.xlu0 %v1123
    %v1125 = vpop.xlane.xlu0 %1124
    %v1126 = vsel %vm73, %v1122, 0.0
    %1127 = vadd.xlane.f32.xlu0 %v1126
    %v1128 = vpop.xlane.xlu0 %1127
    %v1129 = vmul.f32 %v1125, %v1116
    %v1130 = vmul.f32 %v1128, %v1116
    %v1131 = vadd.f32 %v1129, 1e-05
    %v1132 = vadd.f32 %v1130, 1e-05
    %v1133 = vrsqrt.pop %v1131
    %v1134 = vrsqrt.pop %v1132
    %v1135 = vmul.f32 %v1119, %v1133
    %v1136 = vmul.f32 %v1120, %v1134
    %v1137 = vmul.f32 %v1135, %v1085
    %v1138 = vmul.f32 %v1136, %v1085
    %v1139 = vadd.f32 %v1137, %v1092
    %v1140 = vadd.f32 %v1138, %v1092
    %v1141 = vld [vmem:[%s8] sm:$0xff]
    %v1142 = vld [vmem:[%s8 + $0x8] sm:$0xff]
    %v1143 = vld [vmem:[%s8 + $0x10] sm:$0xff]
    %v1144 = vld [vmem:[%s8 + $0x18] sm:$0xff]
    %v1145 = vld [vmem:[%s9] sm:$0x1]
    %v1147 = vlaneseq
    %v1148 = vshrl.u32 %v1147, 7
    %v1149 = vsub.s32 0, %v1148
    %v1150 = vrot.slane %v1145, %v1149
    %v1153 = vsel %vm73, %v1139, 0
    %v1156 = vsel %vm73, %v1140, 0
    %1158 = vmatprep.subr.mxu0 0.0
    %1159 = vmatpush1.msra.mxu0 %v1141
    %1160 = vmatprep.subr.mxu0 0.0
    %1161 = vmatpush1.msra.mxu0 %v1142
    %1162 = vmatprep.subr.mxu0 0.0
    %1163 = vmatpush1.msra.mxu0 %v1143
    %1164 = vmatprep.subr.mxu0 0.0
    %1165 = vmatpush1.msra.mxu0 %v1144
    %1166 = vmatprep.subr.mxu0 0.0
    %1167 = vmatpush1.msra.mxu0 0.0
    %1168 = vmatprep.subr.mxu0 0.0
    %1169 = vmatpush1.msra.mxu0 0.0
    %1170 = vmatprep.subr.mxu0 0.0
    %1171 = vmatpush1.msra.mxu0 0.0
    %1172 = vmatprep.subr.mxu0 0.0
    %1173 = vmatpush1.msra.mxu0 0.0
    %1174 = vmatprep.subr.mxu0 0.0
    %1175 = vmatpush1.msra.mxu0 0.0
    %1176 = vmatprep.subr.mxu0 0.0
    %1177 = vmatpush1.msra.mxu0 0.0
    %1178 = vmatprep.subr.mxu0 0.0
    %1179 = vmatpush1.msra.mxu0 0.0
    %1180 = vmatprep.subr.mxu0 0.0
    %1181 = vmatpush1.msra.mxu0 0.0
    %1182 = vmatprep.subr.mxu0 0.0
    %1183 = vmatpush1.msra.mxu0 0.0
    %1184 = vmatprep.subr.mxu0 0.0
    %1185 = vmatpush1.msra.mxu0 0.0
    %1186 = vmatprep.subr.mxu0 0.0
    %1187 = vmatpush1.msra.mxu0 0.0
    %1188 = vmatprep.subr.mxu0 0.0
    %1189 = vmatpush1.msra.mxu0 0.0
    %1190 = vmatprep.subr.mxu0 0.0
    %1191 = vmatpush1.msra.mxu0 0.0
    %1192 = vmatprep.subr.mxu0 0.0
    %1193 = vmatpush1.msra.mxu0 0.0
    %1194 = vmatprep.subr.mxu0 0.0
    %1195 = vmatpush1.msra.mxu0 0.0
    %1196 = vmatprep.subr.mxu0 0.0
    %1197 = vmatpush1.msra.mxu0 0.0
    %1198 = vmatprep.subr.mxu0 0.0
    %1199 = vmatpush1.msra.mxu0 0.0
    %1200 = vmatprep.subr.mxu0 0.0
    %1201 = vmatpush1.msra.mxu0 0.0
    %1202 = vmatprep.subr.mxu0 0.0
    %1203 = vmatpush1.msra.mxu0 0.0
    %1204 = vmatprep.subr.mxu0 0.0
    %1205 = vmatpush1.msra.mxu0 0.0
    %1206 = vmatprep.subr.mxu0 0.0
    %1207 = vmatpush1.msra.mxu0 0.0
    %1208 = vmatprep.subr.mxu0 0.0
    %1209 = vmatpush1.msra.mxu0 0.0
    %1210 = vmatprep.subr.mxu0 0.0
    %1211 = vmatpush1.msra.mxu0 0.0
    %1212 = vmatprep.subr.mxu0 0.0
    %1213 = vmatpush1.msra.mxu0 0.0
    %1214 = vmatprep.subr.mxu0 0.0
    %1215 = vmatpush1.msra.mxu0 0.0
    %1216 = vmatprep.subr.mxu0 0.0
    %1217 = vmatpush1.msra.mxu0 0.0
    %1218 = vmatprep.subr.mxu0 0.0
    %1219 = vmatpush1.msra.mxu0 0.0
    %1220 = vmatprep.subr.mxu0 0.0
    %1221 = vmatpush1.msra.mxu0 0.0
    %1222 = vmatprep.mubr.f32.mxu0 0.0
    %1223 = vmatmul.mubr.f32.gmra.mrb[0].mxu0 %v1153
    %v1224 = vpop.f32.mrb[0].mxu0
    %v1225 = vadd.f32 %v1150, %v1224
    %v1226 = vpop.f32.mrb[0].mxu0
    %1227 = vmatprep.mubr.f32.mxu0 0.0
    %1228 = vmatmul.mubr.f32.gmra.mrb[0].mxu0 %v1156
    %v1229 = vpop.f32.mrb[0].mxu0
    %v1230 = vadd.f32 %v1150, %v1229
    %v1231 = vpop.f32.mrb[0].mxu0
    %1232 = vdwg.mxu0
    %v1233 = vmax.f32 %v1225, 0.0
    %v1234 = vmax.f32 %v1230, 0.0
    %v1235 = vld [vmem:[%s10] sm:$0xff]
    %v1236 = vld [vmem:[%s10 + $0x8] sm:$0xff]
    %v1237 = vld [vmem:[%s10 + $0x10] sm:$0xff]
    %v1238 = vld [vmem:[%s10 + $0x18] sm:$0xff]
    %v1239 = vld [vmem:[%s10 + $0x20] sm:$0xff]
    %v1240 = vld [vmem:[%s10 + $0x28] sm:$0xff]
    %v1241 = vld [vmem:[%s10 + $0x30] sm:$0xff]
    %v1242 = vld [vmem:[%s10 + $0x38] sm:$0xff]
    %v1243 = vld [vmem:[%s10 + $0x40] sm:$0xff]
    %v1244 = vld [vmem:[%s10 + $0x48] sm:$0xff]
    %v1245 = vld [vmem:[%s10 + $0x50] sm:$0xff]
    %v1246 = vld [vmem:[%s10 + $0x58] sm:$0xff]
    %v1247 = vld [vmem:[%s10 + $0x60] sm:$0xff]
    %v1248 = vld [vmem:[%s10 + $0x68] sm:$0xff]
    %v1249 = vld [vmem:[%s10 + $0x70] sm:$0xff]
    %v1250 = vld [vmem:[%s10 + $0x78] sm:$0xff]
    %v1251 = vld [vmem:[%s11] sm:$0x1]
    %v1253 = vlaneseq
    %v1254 = vshrl.u32 %v1253, 7
    %v1255 = vsub.s32 0, %v1254
    %v1256 = vrot.slane %v1251, %v1255
    %1258 = vmatprep.subr.mxu0 0.0
    %1259 = vmatpush1.msra.mxu0 %v1235
    %1260 = vmatprep.subr.mxu0 0.0
    %1261 = vmatpush1.msra.mxu0 %v1236
    %1262 = vmatprep.subr.mxu0 0.0
    %1263 = vmatpush1.msra.mxu0 %v1237
    %1264 = vmatprep.subr.mxu0 0.0
    %1265 = vmatpush1.msra.mxu0 %v1238
    %1266 = vmatprep.subr.mxu0 0.0
    %1267 = vmatpush1.msra.mxu0 %v1239
    %1268 = vmatprep.subr.mxu0 0.0
    %1269 = vmatpush1.msra.mxu0 %v1240
    %1270 = vmatprep.subr.mxu0 0.0
    %1271 = vmatpush1.msra.mxu0 %v1241
    %1272 = vmatprep.subr.mxu0 0.0
    %1273 = vmatpush1.msra.mxu0 %v1242
    %1274 = vmatprep.subr.mxu0 0.0
    %1275 = vmatpush1.msra.mxu0 %v1243
    %1276 = vmatprep.subr.mxu0 0.0
    %1277 = vmatpush1.msra.mxu0 %v1244
    %1278 = vmatprep.subr.mxu0 0.0
    %1279 = vmatpush1.msra.mxu0 %v1245
    %1280 = vmatprep.subr.mxu0 0.0
    %1281 = vmatpush1.msra.mxu0 %v1246
    %1282 = vmatprep.subr.mxu0 0.0
    %1283 = vmatpush1.msra.mxu0 %v1247
    %1284 = vmatprep.subr.mxu0 0.0
    %1285 = vmatpush1.msra.mxu0 %v1248
    %1286 = vmatprep.subr.mxu0 0.0
    %1287 = vmatpush1.msra.mxu0 %v1249
    %1288 = vmatprep.subr.mxu0 0.0
    %1289 = vmatpush1.msra.mxu0 %v1250
    %1290 = vmatprep.subr.mxu0 0.0
    %1291 = vmatpush1.msra.mxu0 0.0
    %1292 = vmatprep.subr.mxu0 0.0
    %1293 = vmatpush1.msra.mxu0 0.0
    %1294 = vmatprep.subr.mxu0 0.0
    %1295 = vmatpush1.msra.mxu0 0.0
    %1296 = vmatprep.subr.mxu0 0.0
    %1297 = vmatpush1.msra.mxu0 0.0
    %1298 = vmatprep.subr.mxu0 0.0
    %1299 = vmatpush1.msra.mxu0 0.0
    %1300 = vmatprep.subr.mxu0 0.0
    %1301 = vmatpush1.msra.mxu0 0.0
    %1302 = vmatprep.subr.mxu0 0.0
    %1303 = vmatpush1.msra.mxu0 0.0
    %1304 = vmatprep.subr.mxu0 0.0
    %1305 = vmatpush1.msra.mxu0 0.0
    %1306 = vmatprep.subr.mxu0 0.0
    %1307 = vmatpush1.msra.mxu0 0.0
    %1308 = vmatprep.subr.mxu0 0.0
    %1309 = vmatpush1.msra.mxu0 0.0
    %1310 = vmatprep.subr.mxu0 0.0
    %1311 = vmatpush1.msra.mxu0 0.0
    %1312 = vmatprep.subr.mxu0 0.0
    %1313 = vmatpush1.msra.mxu0 0.0
    %1314 = vmatprep.subr.mxu0 0.0
    %1315 = vmatpush1.msra.mxu0 0.0
    %1316 = vmatprep.subr.mxu0 0.0
    %1317 = vmatpush1.msra.mxu0 0.0
    %1318 = vmatprep.subr.mxu0 0.0
    %1319 = vmatpush1.msra.mxu0 0.0
    %1320 = vmatprep.subr.mxu0 0.0
    %1321 = vmatpush1.msra.mxu0 0.0
    %1322 = vmatprep.mubr.f32.mxu0 0.0
    %1323 = vmatmul.mubr.f32.gmra.mrb[0].mxu0 %v1233
    %v1324 = vpop.f32.mrb[0].mxu0
    %v1325 = vadd.f32 %v1256, %v1324
    %v1326 = vpop.f32.mrb[0].mxu0
    %1327 = vmatprep.mubr.f32.mxu0 0.0
    %1328 = vmatmul.mubr.f32.gmra.mrb[0].mxu0 %v1234
    %v1329 = vpop.f32.mrb[0].mxu0
    %v1330 = vadd.f32 %v1256, %v1329
    %v1331 = vpop.f32.mrb[0].mxu0
    %1332 = vdwg.mxu0
    %v1333 = vadd.f32 %v1139, %v1325
    %v1334 = vadd.f32 %v1140, %v1330
    %v1335 = vsel %vm73, %v1333, 0.0
    %1336 = vadd.xlane.f32.xlu0 %v1335
    %v1337 = vpop.xlane.xlu0 %1336
    %v1338 = vsel %vm73, %v1334, 0.0
    %1339 = vadd.xlane.f32.xlu0 %v1338
    %v1340 = vpop.xlane.xlu0 %1339
    %v1341 = vmul.f32 %v1337, %v1116
    %v1342 = vmul.f32 %v1340, %v1116
    %v1343 = vsub.f32 %v1333, %v1341
    %v1344 = vsub.f32 %v1334, %v1342
    %v1345 = vmul.f32 %v1343, %v1343
    %v1346 = vmul.f32 %v1344, %v1344
    %v1347 = vsel %vm73, %v1345, 0.0
    %1348 = vadd.xlane.f32.xlu0 %v1347
    %v1349 = vpop.xlane.xlu0 %1348
    %v1350 = vsel %vm73, %v1346, 0.0
    %1351 = vadd.xlane.f32.xlu0 %v1350
    %v1352 = vpop.xlane.xlu0 %1351
    %v1353 = vmul.f32 %v1349, %v1116
    %v1354 = vmul.f32 %v1352, %v1116
    %v1355 = vadd.f32 %v1353, 1e-05
    %v1356 = vadd.f32 %v1354, 1e-05
    %v1357 = vrsqrt.pop %v1355
    %v1358 = vrsqrt.pop %v1356
    %v1359 = vmul.f32 %v1343, %v1357
    %v1360 = vmul.f32 %v1344, %v1358
    %v1361 = vmul.f32 %v1359, %v1099
    %v1362 = vmul.f32 %v1360, %v1099
    %v1363 = vadd.f32 %v1361, %v1106
    %v1364 = vadd.f32 %v1362, %v1106
    loop: start=0, step=1, limit=7
    $region74: #{swin_transformer_block.1} parent=1 // loop_pre_header
      _
    $region75: #{swin_transformer_block.1} parent=1 // loop_header
      %s1366 = sphi 0, %s1370
      %p1367 = scmp.ge.s32.totalorder %s1366, 7
      %v1371 = vphi %v1363, %v1598
      %v1372 = vphi %v1364, %v1599
    $region76: #{swin_transformer_block.1} parent=1 // loop_header_branch
      %1369 = sbr.rel (%p1367) target = $region80
    $region77: #{swin_transformer_block.1} parent=1 // loop_body
      %s1373 = smul.u32 %s1366, 32
      %s1374 = scalar_lea.vmem %s14, %s1373
      %v1375 = vld [vmem:[%s1374] sm:$0xff]
      %v1376 = vld [vmem:[%s1374 + $0x8] sm:$0xff]
      %v1377 = vld [vmem:[%s1374 + $0x10] sm:$0xff]
      %v1378 = vld [vmem:[%s1374 + $0x18] sm:$0xff]
      %s1379 = scalar_lea.vmem %s15, %s1366
      %v1380 = vld [vmem:[%s1379] sm:$0x1]
      %v1382 = vlaneseq
      %v1383 = vshrl.u32 %v1382, 7
      %v1384 = vsub.s32 0, %v1383
      %v1385 = vrot.slane %v1380, %v1384
      %v1388 = vsel %vm73, %v1371, 0
      %v1391 = vsel %vm73, %v1372, 0
      %1393 = vmatprep.subr.mxu0 0.0
      %1394 = vmatpush1.msra.mxu0 %v1375
      %1395 = vmatprep.subr.mxu0 0.0
      %1396 = vmatpush1.msra.mxu0 %v1376
      %1397 = vmatprep.subr.mxu0 0.0
      %1398 = vmatpush1.msra.mxu0 %v1377
      %1399 = vmatprep.subr.mxu0 0.0
      %1400 = vmatpush1.msra.mxu0 %v1378
      %1401 = vmatprep.subr.mxu0 0.0
      %1402 = vmatpush1.msra.mxu0 0.0
      %1403 = vmatprep.subr.mxu0 0.0
      %1404 = vmatpush1.msra.mxu0 0.0
      %1405 = vmatprep.subr.mxu0 0.0
      %1406 = vmatpush1.msra.mxu0 0.0
      %1407 = vmatprep.subr.mxu0 0.0
      %1408 = vmatpush1.msra.mxu0 0.0
      %1409 = vmatprep.subr.mxu0 0.0
      %1410 = vmatpush1.msra.mxu0 0.0
      %1411 = vmatprep.subr.mxu0 0.0
      %1412 = vmatpush1.msra.mxu0 0.0
      %1413 = vmatprep.subr.mxu0 0.0
      %1414 = vmatpush1.msra.mxu0 0.0
      %1415 = vmatprep.subr.mxu0 0.0
      %1416 = vmatpush1.msra.mxu0 0.0
      %1417 = vmatprep.subr.mxu0 0.0
      %1418 = vmatpush1.msra.mxu0 0.0
      %1419 = vmatprep.subr.mxu0 0.0
      %1420 = vmatpush1.msra.mxu0 0.0
      %1421 = vmatprep.subr.mxu0 0.0
      %1422 = vmatpush1.msra.mxu0 0.0
      %1423 = vmatprep.subr.mxu0 0.0
      %1424 = vmatpush1.msra.mxu0 0.0
      %1425 = vmatprep.subr.mxu0 0.0
      %1426 = vmatpush1.msra.mxu0 0.0
      %1427 = vmatprep.subr.mxu0 0.0
      %1428 = vmatpush1.msra.mxu0 0.0
      %1429 = vmatprep.subr.mxu0 0.0
      %1430 = vmatpush1.msra.mxu0 0.0
      %1431 = vmatprep.subr.mxu0 0.0
      %1432 = vmatpush1.msra.mxu0 0.0
      %1433 = vmatprep.subr.mxu0 0.0
      %1434 = vmatpush1.msra.mxu0 0.0
      %1435 = vmatprep.subr.mxu0 0.0
      %1436 = vmatpush1.msra.mxu0 0.0
      %1437 = vmatprep.subr.mxu0 0.0
      %1438 = vmatpush1.msra.mxu0 0.0
      %1439 = vmatprep.subr.mxu0 0.0
      %1440 = vmatpush1.msra.mxu0 0.0
      %1441 = vmatprep.subr.mxu0 0.0
      %1442 = vmatpush1.msra.mxu0 0.0
      %1443 = vmatprep.subr.mxu0 0.0
      %1444 = vmatpush1.msra.mxu0 0.0
      %1445 = vmatprep.subr.mxu0 0.0
      %1446 = vmatpush1.msra.mxu0 0.0
      %1447 = vmatprep.subr.mxu0 0.0
      %1448 = vmatpush1.msra.mxu0 0.0
      %1449 = vmatprep.subr.mxu0 0.0
      %1450 = vmatpush1.msra.mxu0 0.0
      %1451 = vmatprep.subr.mxu0 0.0
      %1452 = vmatpush1.msra.mxu0 0.0
      %1453 = vmatprep.subr.mxu0 0.0
      %1454 = vmatpush1.msra.mxu0 0.0
      %1455 = vmatprep.subr.mxu0 0.0
      %1456 = vmatpush1.msra.mxu0 0.0
      %1457 = vmatprep.mubr.f32.mxu0 0.0
      %1458 = vmatmul.mubr.f32.gmra.mrb[0].mxu0 %v1388
      %v1459 = vpop.f32.mrb[0].mxu0
      %v1460 = vadd.f32 %v1385, %v1459
      %v1461 = vpop.f32.mrb[0].mxu0
      %1462 = vmatprep.mubr.f32.mxu0 0.0
      %1463 = vmatmul.mubr.f32.gmra.mrb[0].mxu0 %v1391
      %v1464 = vpop.f32.mrb[0].mxu0
      %v1465 = vadd.f32 %v1385, %v1464
      %v1466 = vpop.f32.mrb[0].mxu0
      %1467 = vdwg.mxu0
      %v1468 = vmax.f32 %v1460, 0.0
      %v1469 = vmax.f32 %v1465, 0.0
      %s1470 = smul.u32 %s1366, 48
      %s1471 = scalar_lea.vmem %s16, %s1470
      %v1472 = vld [vmem:[%s1471] sm:$0xff]
      %v1473 = vld [vmem:[%s1471 + $0x8] sm:$0xff]
      %v1474 = vld [vmem:[%s1471 + $0x10] sm:$0xff]
      %v1475 = vld [vmem:[%s1471 + $0x18] sm:$0xff]
      %v1476 = vld [vmem:[%s1471 + $0x20] sm:$0xff]
      %v1477 = vld [vmem:[%s1471 + $0x28] sm:$0xff]
      %s1478 = scalar_lea.vmem %s17, %s1366
      %v1479 = vld [vmem:[%s1478] sm:$0x1]
      %v1481 = vlaneseq
      %v1482 = vshrl.u32 %v1481, 7
      %v1483 = vsub.s32 0, %v1482
      %v1484 = vrot.slane %v1479, %v1483
      %vm1486 = vcmask 392192
      %v1488 = vsel %vm1486, %v1468, 0
      %v1491 = vsel %vm1486, %v1469, 0
      %1493 = vmatprep.subr.mxu0 0.0
      %1494 = vmatpush1.msra.mxu0 %v1472
      %1495 = vmatprep.subr.mxu0 0.0
      %1496 = vmatpush1.msra.mxu0 %v1473
      %1497 = vmatprep.subr.mxu0 0.0
      %1498 = vmatpush1.msra.mxu0 %v1474
      %1499 = vmatprep.subr.mxu0 0.0
      %1500 = vmatpush1.msra.mxu0 %v1475
      %1501 = vmatprep.subr.mxu0 0.0
      %1502 = vmatpush1.msra.mxu0 %v1476
      %1503 = vmatprep.subr.mxu0 0.0
      %1504 = vmatpush1.msra.mxu0 %v1477
      %1505 = vmatprep.subr.mxu0 0.0
      %1506 = vmatpush1.msra.mxu0 0.0
      %1507 = vmatprep.subr.mxu0 0.0
      %1508 = vmatpush1.msra.mxu0 0.0
      %1509 = vmatprep.subr.mxu0 0.0
      %1510 = vmatpush1.msra.mxu0 0.0
      %1511 = vmatprep.subr.mxu0 0.0
      %1512 = vmatpush1.msra.mxu0 0.0
      %1513 = vmatprep.subr.mxu0 0.0
      %1514 = vmatpush1.msra.mxu0 0.0
      %1515 = vmatprep.subr.mxu0 0.0
      %1516 = vmatpush1.msra.mxu0 0.0
      %1517 = vmatprep.subr.mxu0 0.0
      %1518 = vmatpush1.msra.mxu0 0.0
      %1519 = vmatprep.subr.mxu0 0.0
      %1520 = vmatpush1.msra.mxu0 0.0
      %1521 = vmatprep.subr.mxu0 0.0
      %1522 = vmatpush1.msra.mxu0 0.0
      %1523 = vmatprep.subr.mxu0 0.0
      %1524 = vmatpush1.msra.mxu0 0.0
      %1525 = vmatprep.subr.mxu0 0.0
      %1526 = vmatpush1.msra.mxu0 0.0
      %1527 = vmatprep.subr.mxu0 0.0
      %1528 = vmatpush1.msra.mxu0 0.0
      %1529 = vmatprep.subr.mxu0 0.0
      %1530 = vmatpush1.msra.mxu0 0.0
      %1531 = vmatprep.subr.mxu0 0.0
      %1532 = vmatpush1.msra.mxu0 0.0
      %1533 = vmatprep.subr.mxu0 0.0
      %1534 = vmatpush1.msra.mxu0 0.0
      %1535 = vmatprep.subr.mxu0 0.0
      %1536 = vmatpush1.msra.mxu0 0.0
      %1537 = vmatprep.subr.mxu0 0.0
      %1538 = vmatpush1.msra.mxu0 0.0
      %1539 = vmatprep.subr.mxu0 0.0
      %1540 = vmatpush1.msra.mxu0 0.0
      %1541 = vmatprep.subr.mxu0 0.0
      %1542 = vmatpush1.msra.mxu0 0.0
      %1543 = vmatprep.subr.mxu0 0.0
      %1544 = vmatpush1.msra.mxu0 0.0
      %1545 = vmatprep.subr.mxu0 0.0
      %1546 = vmatpush1.msra.mxu0 0.0
      %1547 = vmatprep.subr.mxu0 0.0
      %1548 = vmatpush1.msra.mxu0 0.0
      %1549 = vmatprep.subr.mxu0 0.0
      %1550 = vmatpush1.msra.mxu0 0.0
      %1551 = vmatprep.subr.mxu0 0.0
      %1552 = vmatpush1.msra.mxu0 0.0
      %1553 = vmatprep.subr.mxu0 0.0
      %1554 = vmatpush1.msra.mxu0 0.0
      %1555 = vmatprep.subr.mxu0 0.0
      %1556 = vmatpush1.msra.mxu0 0.0
      %1557 = vmatprep.mubr.f32.mxu0 0.0
      %1558 = vmatmul.mubr.f32.gmra.mrb[0].mxu0 %v1488
      %v1559 = vpop.f32.mrb[0].mxu0
      %v1560 = vadd.f32 %v1484, %v1559
      %v1561 = vpop.f32.mrb[0].mxu0
      %1562 = vmatprep.mubr.f32.mxu0 0.0
      %1563 = vmatmul.mubr.f32.gmra.mrb[0].mxu0 %v1491
      %v1564 = vpop.f32.mrb[0].mxu0
      %v1565 = vadd.f32 %v1484, %v1564
      %v1566 = vpop.f32.mrb[0].mxu0
      %1567 = vdwg.mxu0
      %v1568 = vadd.f32 %v1371, %v1560
      %v1569 = vadd.f32 %v1372, %v1565
      %v1570 = vsel %vm73, %v1568, 0.0
      %1571 = vadd.xlane.f32.xlu0 %v1570
      %v1572 = vpop.xlane.xlu0 %1571
      %v1573 = vsel %vm73, %v1569, 0.0
      %1574 = vadd.xlane.f32.xlu0 %v1573
      %v1575 = vpop.xlane.xlu0 %1574
      %v1576 = vmul.f32 %v1572, %v1116
      %v1577 = vmul.f32 %v1575, %v1116
      %v1578 = vsub.f32 %v1568, %v1576
      %v1579 = vsub.f32 %v1569, %v1577
      %v1580 = vmul.f32 %v1578, %v1578
      %v1581 = vmul.f32 %v1579, %v1579
      %v1582 = vsel %vm73, %v1580, 0.0
      %1583 = vadd.xlane.f32.xlu0 %v1582
      %v1584 = vpop.xlane.xlu0 %1583
      %v1585 = vsel %vm73, %v1581, 0.0
      %1586 = vadd.xlane.f32.xlu0 %v1585
      %v1587 = vpop.xlane.xlu0 %1586
      %v1588 = vmul.f32 %v1584, %v1116
      %v1589 = vmul.f32 %v1587, %v1116
      %v1590 = vadd.f32 %v1588, 1e-05
      %v1591 = vadd.f32 %v1589, 1e-05
      %v1592 = vrsqrt.pop %v1590
      %v1593 = vrsqrt.pop %v1591
      %v1594 = vmul.f32 %v1578, %v1592
      %v1595 = vmul.f32 %v1579, %v1593
      %v1596 = vmul.f32 %v1594, %v1099
      %v1597 = vmul.f32 %v1595, %v1099
      %v1598 = vadd.f32 %v1596, %v1106
      %v1599 = vadd.f32 %v1597, %v1106
    $region78: #{swin_transformer_block.1} parent=1 // loop_footer
      %s1370 = sadd.s32 1, %s1366
    $region79: #{swin_transformer_block.1} parent=1 // loop_footer_branch
      %1365 = sbr.rel target = $region75
    $region80: #{swin_transformer_block.1} parent=1 // loop_exit
      _
    %1600 = vst.msk [vmem:[#allocation2] sm:$0xff] %vm73, %v1371
    %1601 = vst.msk [vmem:[#allocation2 + $0x8] sm:$0xff] %vm73, %v1372
    // Predicated region
    $region81: #{swin_transformer_block.1} parent=1 // pred_check
      _
    $region82: #{swin_transformer_block.1} parent=1 // pred_check_branch
      %1603 = sbr.rel (0) target = $region84
    $region83: #{swin_transformer_block.1} parent=1 // pred_region
      %s1605 = ssub.s32 256, 256
      %1606 = vsyncadd [#allocation3], %s1605
      %s1607 = sshll.u32 [#allocation2], 4
      %s1608 = int_to_ptr.vmem [resolvable:$true] %s1607
      %1613 = dma.vmem_to_hbm [thread:$0]  %s1608, 256, %s18, [#allocation3], 128, 128, 8
    $region84: #{swin_transformer_block.1} parent=1 // pred_fallthru
      _
    // Predicated region
    $region85: #{swin_transformer_block.1} parent=1 // pred_check
      _
    $region86: #{swin_transformer_block.1} parent=1 // pred_check_branch
      %1615 = sbr.rel (0) target = $region88
    $region87: #{swin_transformer_block.1} parent=1 // pred_region
      %1616 = dma.done [#allocation3], 256
    $region88: #{swin_transformer_block.1} parent=1 // pred_fallthru
      _
    %1617 = vsyncpa [#allocation3], 1

</llo_original>
